<compile_context>
chip_gen: v6e
topology: v6e:2x2x1
jax: 0.10.0
libtpu: 0.0.40
codegen_flags: <defaults>
</compile_context>

<pallas_src>
import math
import functools

import jax
import jax.numpy as jnp
from jax import lax
from jax.experimental import pallas as pl
from jax.experimental.pallas import tpu as pltpu


# ----------------------------------------------------------------------------
# Helpers.
# ----------------------------------------------------------------------------
def _round_up(n, m):
    return ((n + m - 1) // m) * m


def _pick_tile(dim, cap, align):
    """Largest tile <= cap that divides dim (multiple of align); else full dim."""
    if dim <= cap:
        return dim
    t = (cap // align) * align
    while t >= align:
        if dim % t == 0:
            return t
        t -= align
    return dim


def _vmem_limit(nbytes):
    """Scoped-VMEM limit: 2x the computed footprint, >=32MiB, <=~56MiB (v7x)."""
    want = max(32 << 20, 2 * int(nbytes))
    return int(max(min(want, 56 << 20), int(nbytes) + (2 << 20)))


# ----------------------------------------------------------------------------
# Kernel 1: tiled GEMM + bias   y = x @ w_t + b      (w_t pre-transposed, bf16)
# ----------------------------------------------------------------------------
def _linear_bias_kernel(x_ref, wt_ref, b_ref, o_ref, acc_ref):
    @pl.when(pl.program_id(2) == 0)
    def _():
        acc_ref[...] = jnp.zeros(acc_ref.shape, jnp.float32)

    # Cast the activation block to the weight dtype (bf16) so the MXU runs at
    # bf16 rate; accumulate in f32.
    acc_ref[...] += jnp.dot(x_ref[...].astype(wt_ref.dtype), wt_ref[...],
                            preferred_element_type=jnp.float32)

    @pl.when(pl.program_id(2) == pl.num_programs(2) - 1)
    def _():
        o_ref[...] = (acc_ref[...] + b_ref[...]).astype(o_ref.dtype)


def linear_bias(x, w_t, bias, *, out_dtype=None, tm_cap=256, tn_cap=512,
                tk_cap=1024):
    """x: (N, K), w_t: (K, M) [bf16], bias: (M,) -> (N, M) in out_dtype."""
    n, k_dim = x.shape
    kw, m_out = w_t.shape
    assert kw == k_dim
    out_dtype = jnp.dtype(out_dtype) if out_dtype is not None else x.dtype

    tn = _pick_tile(m_out, tn_cap, 128)
    tk = _pick_tile(k_dim, tk_cap, 128)
    tm = min(tm_cap, _round_up(n, 8))
    n_pad = _round_up(n, tm)
    x_p = jnp.pad(x, ((0, n_pad - n), (0, 0))) if n_pad != n else x

    grid = (n_pad // tm, m_out // tn, k_dim // tk)
    vmem = (2 * (tm * tk * x.dtype.itemsize + tk * tn * w_t.dtype.itemsize)
            + 2 * tm * tn * out_dtype.itemsize + tm * tn * 4 + 2 * tn * 4)

    out = pl.pallas_call(
        _linear_bias_kernel,
        grid=grid,
        in_specs=[
            pl.BlockSpec((tm, tk), lambda i, j, kk: (i, kk)),
            pl.BlockSpec((tk, tn), lambda i, j, kk: (kk, j)),
            pl.BlockSpec((1, tn), lambda i, j, kk: (0, j)),
        ],
        out_specs=pl.BlockSpec((tm, tn), lambda i, j, kk: (i, j)),
        out_shape=jax.ShapeDtypeStruct((n_pad, m_out), out_dtype),
        scratch_shapes=[pltpu.VMEM((tm, tn), jnp.float32)],
        compiler_params=pltpu.CompilerParams(
            dimension_semantics=("parallel", "parallel", "arbitrary"),
            vmem_limit_bytes=_vmem_limit(vmem)),
    )(x_p, w_t, bias.astype(jnp.float32).reshape(1, -1))
    return out[:n] if n_pad != n else out


# ----------------------------------------------------------------------------
# Kernel 2: flash-style multi-head attention on (B, L, E) layout.
# Grid: (batch, q-block, kv-block); all heads handled per grid step.
# 1/sqrt(D) is pre-folded into Wq/biq, so no scaling happens here.
# ----------------------------------------------------------------------------
def _flash_attn_kernel(q_ref, k_ref, v_ref, o_ref, m_ref, l_ref, acc_ref, *,
                       num_heads, head_dim, kv_valid, kv_block):
    H, D = num_heads, head_dim
    kv_idx = pl.program_id(2)
    needs_mask = (kv_valid % kv_block) != 0      # static python bool

    @pl.when(kv_idx == 0)
    def _():
        m_ref[...] = jnp.full(m_ref.shape, -jnp.inf, jnp.float32)
        l_ref[...] = jnp.zeros(l_ref.shape, jnp.float32)
        acc_ref[...] = jnp.zeros(acc_ref.shape, jnp.float32)

    q = q_ref[0]          # (tl, E) bf16
    k = k_ref[0]          # (ts, E) bf16
    v = v_ref[0]          # (ts, E) bf16

    if needs_mask:
        kv_pos = kv_idx * kv_block + lax.broadcasted_iota(
            jnp.int32, (1, kv_block), 1)
        kv_ok = kv_pos < kv_valid                      # (1, ts)

    # Softmax state: single load here, single store after the head loop
    # (no per-head width-1 masked scratch writes inside the loop).
    m_prev = m_ref[...]                                # (tl, H)
    l_prev = l_ref[...]                                # (tl, H)

    # TODO(synk): for head_dim < 128 the per-head lane slices below are not
    # 128-lane aligned (relayout tax); a 128-lane head-grouping would remove it.
    m_cols, l_cols = [], []
    for h in range(H):
        lo = h * D
        q_h = q[:, lo:lo + D]                          # (tl, D)
        k_h = k[:, lo:lo + D]                          # (ts, D)
        v_h = v[:, lo:lo + D]                          # (ts, D)
        # q_h @ k_h.T without an explicit transpose; f32 accumulation.
        s = lax.dot_general(q_h, k_h, (((1,), (1,)), ((), ())),
                            preferred_element_type=jnp.float32)   # (tl, ts)
        if needs_mask:
            s = jnp.where(kv_ok, s, -1e30)
        m_p = m_prev[:, h:h + 1]                       # (tl, 1)
        m_n = jnp.maximum(m_p, jnp.max(s, axis=-1, keepdims=True))
        alpha = jnp.exp(m_p - m_n)                     # f32 (safe on v5e too)
        p = jnp.exp(s - m_n)
        l_cols.append(alpha * l_prev[:, h:h + 1]
                      + jnp.sum(p, axis=-1, keepdims=True))
        m_cols.append(m_n)
        acc_ref[:, lo:lo + D] = alpha * acc_ref[:, lo:lo + D] + jnp.dot(
            p.astype(v_h.dtype), v_h, preferred_element_type=jnp.float32)
    m_ref[...] = jnp.concatenate(m_cols, axis=1)
    l_ref[...] = jnp.concatenate(l_cols, axis=1)

    @pl.when(kv_idx == pl.num_programs(2) - 1)
    def _():
        inv = pl.reciprocal(l_ref[...], approx=True)   # (tl, H), EUP slot
        parts = []
        for h in range(H):
            lo = h * D
            parts.append(acc_ref[:, lo:lo + D] * inv[:, h:h + 1])
        # One lane-dense (tl, E) store.
        o_ref[0] = jnp.concatenate(parts, axis=-1).astype(o_ref.dtype)


def _attn_call(arrays, in_specs, B, L_pad, S_pad, E, num_heads, tl, ts,
               kv_valid, out_dtype):
    kernel = functools.partial(_flash_attn_kernel, num_heads=num_heads,
                               head_dim=E // num_heads, kv_valid=kv_valid,
                               kv_block=ts)
    in_bytes = arrays[0].dtype.itemsize
    out_bytes = jnp.dtype(out_dtype).itemsize
    vmem = (2 * (tl * E + 2 * ts * E) * in_bytes
            + 2 * tl * E * out_bytes
            + tl * E * 4 + 2 * tl * num_heads * 4)
    return pl.pallas_call(
        kernel,
        grid=(B, L_pad // tl, S_pad // ts),
        in_specs=in_specs,
        out_specs=pl.BlockSpec((1, tl, E), lambda b, i, s: (b, i, 0)),
        out_shape=jax.ShapeDtypeStruct((B, L_pad, E), out_dtype),
        scratch_shapes=[
            pltpu.VMEM((tl, num_heads), jnp.float32),   # running max m
            pltpu.VMEM((tl, num_heads), jnp.float32),   # running sum l
            pltpu.VMEM((tl, E), jnp.float32),           # output accumulator
        ],
        compiler_params=pltpu.CompilerParams(
            dimension_semantics=("parallel", "parallel", "arbitrary"),
            vmem_limit_bytes=_vmem_limit(vmem)),
    )(*arrays)


def flash_attention(q, k, v, num_heads, *, tl_cap=256, ts_cap=512):
    """q: (B, L, E), k/v: (B, S, E); head h occupies lanes [h*D, (h+1)*D)."""
    B, L, E = q.shape
    S = k.shape[1]
    tl = min(tl_cap, _round_up(L, 8))
    ts = min(ts_cap, _round_up(S, 8))
    L_pad = _round_up(L, tl)
    S_pad = _round_up(S, ts)
    qp = jnp.pad(q, ((0, 0), (0, L_pad - L), (0, 0))) if L_pad != L else q
    kp = jnp.pad(k, ((0, 0), (0, S_pad - S), (0, 0))) if S_pad != S else k
    vp = jnp.pad(v, ((0, 0), (0, S_pad - S), (0, 0))) if S_pad != S else v
    in_specs = [pl.BlockSpec((1, tl, E), lambda b, i, s: (b, i, 0)),
                pl.BlockSpec((1, ts, E), lambda b, i, s: (b, s, 0)),
                pl.BlockSpec((1, ts, E), lambda b, i, s: (b, s, 0))]
    out = _attn_call((qp, kp, vp), in_specs, B, L_pad, S_pad, E, num_heads,
                     tl, ts, S, q.dtype)
    return out[:, :L] if L_pad != L else out


def flash_attention_fused(qkv, num_heads, *, t_cap=256):
    """Self-attention directly on the fused (B, L, 3E) qkv buffer.

    q / k / v are NOT materialized: the same buffer is passed three times and
    the BlockSpec index_maps pick last-axis block 0 / 1 / 2.  Requires E % 128.
    """
    B, L, E3 = qkv.shape
    E = E3 // 3
    t = min(t_cap, _round_up(L, 8))
    L_pad = _round_up(L, t)
    qkv_p = jnp.pad(qkv, ((0, 0), (0, L_pad - L), (0, 0))) if L_pad != L else qkv
    in_specs = [pl.BlockSpec((1, t, E), lambda b, i, s: (b, i, 0)),
                pl.BlockSpec((1, t, E), lambda b, i, s: (b, s, 1)),
                pl.BlockSpec((1, t, E), lambda b, i, s: (b, s, 2))]
    out = _attn_call((qkv_p, qkv_p, qkv_p), in_specs, B, L_pad, L_pad, E,
                     num_heads, t, t, L, qkv.dtype)
    return out[:, :L] if L_pad != L else out


# ----------------------------------------------------------------------------
# One-time weight preparation (hoisted out of the per-call path):
#   W_eff = W + scaling * B @ A ;  1/sqrt(D) folded into Wq/biq ;
#   fused (E, 3E) pre-transposed QKV weight ; bf16 casts.
# ----------------------------------------------------------------------------
def prepare_params(params, num_heads):
    E = params["wq"].shape[0]
    D = E // num_heads
    s = params["scaling"]
    scale = 1.0 / math.sqrt(D)
    bf16 = jnp.bfloat16

    def merge(w, a, b):
        return w + s * (b @ a)

    wq = merge(params["wq"], params["aq"], params["lbq"]) * scale
    wk = merge(params["wk"], params["ak"], params["lbk"])
    wv = merge(params["wv"], params["av"], params["lbv"])
    wo = merge(params["wo"], params["ao"], params["lbo"])
    biq = params["biq"] * scale

    return {
        "w_qkv_t": jnp.concatenate([wq, wk, wv], axis=0).T.astype(bf16),
        "b_qkv": jnp.concatenate([biq, params["bik"], params["biv"]]
                                 ).astype(jnp.float32),
        "wq_t": wq.T.astype(bf16), "biq": biq.astype(jnp.float32),
        "wk_t": wk.T.astype(bf16), "bik": params["bik"].astype(jnp.float32),
        "wv_t": wv.T.astype(bf16), "biv": params["biv"].astype(jnp.float32),
        "wo_t": wo.T.astype(bf16), "bio": params["bio"].astype(jnp.float32),
    }


# ----------------------------------------------------------------------------
# Full forward (eval mode, batch_first=True, no masks).
# ----------------------------------------------------------------------------
def mha_lora_forward(prep, query, key, value, num_heads, self_attention=False):
    B, L, E = query.shape
    assert E % num_heads == 0
    out_dtype = query.dtype
    bf16 = jnp.bfloat16

    if self_attention:
        # Fused q/k/v projection: one GEMM, x read from HBM once, bf16 out.
        qkv = linear_bias(query.reshape(B * L, E), prep["w_qkv_t"],
                          prep["b_qkv"], out_dtype=bf16).reshape(B, L, 3 * E)
        if E % 128 == 0:
            attn = flash_attention_fused(qkv, num_heads)
        else:
            # Fallback for lane-unaligned E: slice (extra HBM traffic).
            attn = flash_attention(qkv[:, :, :E], qkv[:, :, E:2 * E],
                                   qkv[:, :, 2 * E:], num_heads)
    else:
        S = key.shape[1]
        q3 = linear_bias(query.reshape(B * L, E), prep["wq_t"], prep["biq"],
                         out_dtype=bf16).reshape(B, L, E)
        k3 = linear_bias(key.reshape(B * S, E), prep["wk_t"], prep["bik"],
                         out_dtype=bf16).reshape(B, S, E)
        v3 = linear_bias(value.reshape(B * S, E), prep["wv_t"], prep["biv"],
                         out_dtype=bf16).reshape(B, S, E)
        attn = flash_attention(q3, k3, v3, num_heads)

    out = linear_bias(attn.reshape(B * L, E), prep["wo_t"], prep["bio"],
                      out_dtype=out_dtype)
    return out.reshape(B, L, E)
    # TODO(synk): attn_mask / key_padding_mask / training-time LoRA dropout
    # paths are not implemented (forward here corresponds to eval mode).


# ----------------------------------------------------------------------------
# Pure-JAX f32 reference (mirrors the PyTorch forward exactly).
# ----------------------------------------------------------------------------
def _reference(params, query, key, value, num_heads):
    def lin(x, w, b, a, lb, s):
        return x @ w.T + b + s * (x @ a.T) @ lb.T

    B, L, E = query.shape
    S = key.shape[1]
    H = num_heads
    D = E // H
    s = params["scaling"]
    q = lin(query.reshape(-1, E), params["wq"], params["biq"],
            params["aq"], params["lbq"], s)
    k = lin(key.reshape(-1, E), params["wk"], params["bik"],
            params["ak"], params["lbk"], s)
    v = lin(value.reshape(-1, E), params["wv"], params["biv"],
            params["av"], params["lbv"], s)
    q4 = q.reshape(B, L, H, D).transpose(0, 2, 1, 3)
    k4 = k.reshape(B, S, H, D).transpose(0, 2, 1, 3)
    v4 = v.reshape(B, S, H, D).transpose(0, 2, 1, 3)
    logits = jnp.einsum("bhld,bhsd->bhls", q4, k4) / math.sqrt(D)
    p = jax.nn.softmax(logits, axis=-1)
    attn = jnp.einsum("bhls,bhsd->bhld", p, v4)
    rows = attn.transpose(2, 0, 1, 3).reshape(L * B, E)
    out = lin(rows, params["wo"], params["bio"], params["ao"], params["lbo"], s)
    return out.reshape(L, B, E).transpose(1, 0, 2)


def make_params(key, embed_dim, r, lora_alpha):
    ks = jax.random.split(key, 16)
    E = embed_dim

    def w(k, shape, s=0.05):
        return (s * jax.random.normal(k, shape)).astype(jnp.float32)

    return {
        "wq": w(ks[0], (E, E)), "biq": w(ks[1], (E,)),
        "wk": w(ks[2], (E, E)), "bik": w(ks[3], (E,)),
        "wv": w(ks[4], (E, E)), "biv": w(ks[5], (E,)),
        "wo": w(ks[6], (E, E)), "bio": w(ks[7], (E,)),
        # LoRA: A (r, E), B (E, r).  Nonzero B so the adapter path is exercised.
        "aq": w(ks[8], (r, E)),  "lbq": w(ks[9], (E, r)),
        "ak": w(ks[10], (r, E)), "lbk": w(ks[11], (E, r)),
        "av": w(ks[12], (r, E)), "lbv": w(ks[13], (E, r)),
        "ao": w(ks[14], (r, E)), "lbo": w(ks[15], (E, r)),
        "scaling": float(lora_alpha) / float(r),
    }


if __name__ == "__main__":
    # Small shapes: batch=2, seq=8 (q) / 12 (kv cross), embed=128, heads=4, r=4.
    # E=128 exercises the fused no-slice qkv BlockSpec path; S=12 exercises the
    # kv padding + in-kernel key masking path.
    B, L, S2, E, H, r, lora_alpha = 2, 8, 12, 128, 4, 4, 8

    root = jax.random.PRNGKey(0)
    kp, kq, kk, kv = jax.random.split(root, 4)
    params = make_params(kp, E, r, lora_alpha)
    prep = prepare_params(params, H)          # one-time weight prep (hoisted)

    fwd = jax.jit(mha_lora_forward, static_argnums=(4, 5))

    # 1) Self-attention (fused QKV projection + fused flash BlockSpecs).
    x = jax.random.normal(kq, (B, L, E), dtype=jnp.float32)
    out_self = jax.block_until_ready(fwd(prep, x, x, x, H, True))
    ref_self = _reference(params, x, x, x, H)
    assert out_self.shape == (B, L, E)
    err = float(jnp.max(jnp.abs(out_self - ref_self)))
    assert err < 3e-2, f"self-attention mismatch vs reference: {err}"

    # 2) Cross-attention (separate q/k/v projections, masked kv padding).
    q_in = x
    k_in = jax.random.normal(kk, (B, S2, E), dtype=jnp.float32)
    v_in = jax.random.normal(kv, (B, S2, E), dtype=jnp.float32)
    out_cross = jax.block_until_ready(fwd(prep, q_in, k_in, v_in, H, False))
    ref_cross = _reference(params, q_in, k_in, v_in, H)
    assert out_cross.shape == (B, L, E)
    err = float(jnp.max(jnp.abs(out_cross - ref_cross)))
    assert err < 3e-2, f"cross-attention mismatch vs reference: {err}"

    print("KERNEL_OK")
</pallas_src>

<mosaic_0001>
module attributes {stable_mosaic.version = 11 : i64} {
  func.func @_linear_bias_kernel(%arg0: i32, %arg1: i32, %arg2: i32, %arg3: memref<16x128xf32, #tpu.memory_space<vmem>>, %arg4: memref<128x384xbf16, #tpu.memory_space<vmem>>, %arg5: memref<1x384xf32, #tpu.memory_space<vmem>>, %arg6: memref<16x384xbf16, #tpu.memory_space<vmem>>, %arg7: memref<16x384xf32, #tpu.memory_space<vmem>>) attributes {dimension_semantics = [#tpu.dimension_semantics<parallel>, #tpu.dimension_semantics<parallel>, #tpu.dimension_semantics<arbitrary>], iteration_bounds = array<i64: 1, 1, 1>, scalar_prefetch = 0 : i64, scratch_operands = 1 : i64, tpu.core_type = #tpu.core_type<tc>, window_params = [{transform_indices = @transform_0, window_bounds = array<i64: 16, 128>}, {transform_indices = @transform_1, window_bounds = array<i64: 128, 384>}, {transform_indices = @transform_2, window_bounds = array<i64: 1, 384>}, {transform_indices = @transform_3, window_bounds = array<i64: 16, 384>}]} {
    %c0_i32 = arith.constant 0 : i32
    %0 = arith.cmpi eq, %arg2, %c0_i32 : i32
    %1 = arith.extui %0 : i1 to i32
    %c0_i32_0 = arith.constant 0 : i32
    %2 = arith.cmpi ne, %1, %c0_i32_0 : i32
    scf.if %2 {
      %cst_10 = arith.constant 0.000000e+00 : f32
      %13 = vector.broadcast %cst_10 : f32 to vector<16x384xf32>
      %c0_11 = arith.constant 0 : index
      %c0_12 = arith.constant 0 : index
      %14 = vector.load %arg7[%c0_11, %c0_12] : memref<16x384xf32, #tpu.memory_space<vmem>>, vector<16x384xf32>
      tpu.vector_store %arg7[%c0_11, %c0_12], %13 {strides = array<i32>} : memref<16x384xf32, #tpu.memory_space<vmem>>, vector<16x384xf32>,
    } else {
    }
    %c0 = arith.constant 0 : index
    %c0_1 = arith.constant 0 : index
    %3 = vector.load %arg7[%c0, %c0_1] : memref<16x384xf32, #tpu.memory_space<vmem>>, vector<16x384xf32>
    %c0_2 = arith.constant 0 : index
    %c0_3 = arith.constant 0 : index
    %4 = vector.load %arg3[%c0_2, %c0_3] : memref<16x128xf32, #tpu.memory_space<vmem>>, vector<16x128xf32>
    %5 = arith.truncf %4 : vector<16x128xf32> to vector<16x128xbf16>
    %c0_4 = arith.constant 0 : index
    %c0_5 = arith.constant 0 : index
    %6 = vector.load %arg4[%c0_4, %c0_5] : memref<128x384xbf16, #tpu.memory_space<vmem>>, vector<128x384xbf16>
    %cst = arith.constant dense<0.000000e+00> : vector<16x384xf32>
    %7 = tpu.matmul %5, %6, %cst {dimension_numbers = #tpu.dot_dimension_numbers<[1], [0], [0], [1], [0, 0, 1, 1], [], []>} : vector<16x128xbf16>, vector<128x384xbf16>, vector<16x384xf32> -> vector<16x384xf32>
    %8 = arith.addf %3, %7 : vector<16x384xf32>
    %c0_6 = arith.constant 0 : index
    %c0_7 = arith.constant 0 : index
    %9 = vector.load %arg7[%c0_6, %c0_7] : memref<16x384xf32, #tpu.memory_space<vmem>>, vector<16x384xf32>
    tpu.vector_store %arg7[%c0_6, %c0_7], %8 {strides = array<i32>} : memref<16x384xf32, #tpu.memory_space<vmem>>, vector<16x384xf32>,
    %c0_i32_8 = arith.constant 0 : i32
    %10 = arith.cmpi eq, %arg2, %c0_i32_8 : i32
    %11 = arith.extui %10 : i1 to i32
    %c0_i32_9 = arith.constant 0 : i32
    %12 = arith.cmpi ne, %11, %c0_i32_9 : i32
    scf.if %12 {
      %c0_10 = arith.constant 0 : index
      %c0_11 = arith.constant 0 : index
      %13 = vector.load %arg7[%c0_10, %c0_11] : memref<16x384xf32, #tpu.memory_space<vmem>>, vector<16x384xf32>
      %c0_12 = arith.constant 0 : index
      %c0_13 = arith.constant 0 : index
      %14 = vector.load %arg5[%c0_12, %c0_13] : memref<1x384xf32, #tpu.memory_space<vmem>>, vector<1x384xf32>
      %15 = vector.broadcast %14 : vector<1x384xf32> to vector<16x384xf32>
      %16 = arith.addf %13, %15 : vector<16x384xf32>
      %17 = arith.truncf %16 : vector<16x384xf32> to vector<16x384xbf16>
      %c0_14 = arith.constant 0 : index
      %c0_15 = arith.constant 0 : index
      %18 = vector.load %arg6[%c0_14, %c0_15] : memref<16x384xbf16, #tpu.memory_space<vmem>>, vector<16x384xbf16>
      tpu.vector_store %arg6[%c0_14, %c0_15], %17 {strides = array<i32>} : memref<16x384xbf16, #tpu.memory_space<vmem>>, vector<16x384xbf16>,
    } else {
    }
    return
  }
  func.func @transform_0(%arg0: i32, %arg1: i32, %arg2: i32) -> (i32, i32) {
    %c0_i32 = arith.constant 0 : i32
    return %arg0, %arg2 : i32, i32
  }
  func.func @transform_1(%arg0: i32, %arg1: i32, %arg2: i32) -> (i32, i32) {
    %c0_i32 = arith.constant 0 : i32
    return %arg2, %arg1 : i32, i32
  }
  func.func @transform_2(%arg0: i32, %arg1: i32, %arg2: i32) -> (i32, i32) {
    %c0_i32 = arith.constant 0 : i32
    %c0_i32_0 = arith.constant 0 : i32
    return %c0_i32, %arg1 : i32, i32
  }
  func.func @transform_3(%arg0: i32, %arg1: i32, %arg2: i32) -> (i32, i32) {
    %c0_i32 = arith.constant 0 : i32
    return %arg0, %arg1 : i32, i32
  }
}

module attributes {stable_mosaic.version = 11 : i64} {
  func.func @_linear_bias_kernel(%arg0: i32, %arg1: i32, %arg2: i32, %arg3: memref<16x128xbf16, #tpu.memory_space<vmem>>, %arg4: memref<128x128xbf16, #tpu.memory_space<vmem>>, %arg5: memref<1x128xf32, #tpu.memory_space<vmem>>, %arg6: memref<16x128xf32, #tpu.memory_space<vmem>>, %arg7: memref<16x128xf32, #tpu.memory_space<vmem>>) attributes {dimension_semantics = [#tpu.dimension_semantics<parallel>, #tpu.dimension_semantics<parallel>, #tpu.dimension_semantics<arbitrary>], iteration_bounds = array<i64: 1, 1, 1>, scalar_prefetch = 0 : i64, scratch_operands = 1 : i64, tpu.core_type = #tpu.core_type<tc>, window_params = [{transform_indices = @transform_0, window_bounds = array<i64: 16, 128>}, {transform_indices = @transform_1, window_bounds = array<i64: 128, 128>}, {transform_indices = @transform_2, window_bounds = array<i64: 1, 128>}, {transform_indices = @transform_3, window_bounds = array<i64: 16, 128>}]} {
    %c0_i32 = arith.constant 0 : i32
    %0 = arith.cmpi eq, %arg2, %c0_i32 : i32
    %1 = arith.extui %0 : i1 to i32
    %c0_i32_0 = arith.constant 0 : i32
    %2 = arith.cmpi ne, %1, %c0_i32_0 : i32
    scf.if %2 {
      %cst_10 = arith.constant 0.000000e+00 : f32
      %12 = vector.broadcast %cst_10 : f32 to vector<16x128xf32>
      %c0_11 = arith.constant 0 : index
      %c0_12 = arith.constant 0 : index
      %13 = vector.load %arg7[%c0_11, %c0_12] : memref<16x128xf32, #tpu.memory_space<vmem>>, vector<16x128xf32>
      tpu.vector_store %arg7[%c0_11, %c0_12], %12 {strides = array<i32>} : memref<16x128xf32, #tpu.memory_space<vmem>>, vector<16x128xf32>,
    } else {
    }
    %c0 = arith.constant 0 : index
    %c0_1 = arith.constant 0 : index
    %3 = vector.load %arg7[%c0, %c0_1] : memref<16x128xf32, #tpu.memory_space<vmem>>, vector<16x128xf32>
    %c0_2 = arith.constant 0 : index
    %c0_3 = arith.constant 0 : index
    %4 = vector.load %arg3[%c0_2, %c0_3] : memref<16x128xbf16, #tpu.memory_space<vmem>>, vector<16x128xbf16>
    %c0_4 = arith.constant 0 : index
    %c0_5 = arith.constant 0 : index
    %5 = vector.load %arg4[%c0_4, %c0_5] : memref<128x128xbf16, #tpu.memory_space<vmem>>, vector<128x128xbf16>
    %cst = arith.constant dense<0.000000e+00> : vector<16x128xf32>
    %6 = tpu.matmul %4, %5, %cst {dimension_numbers = #tpu.dot_dimension_numbers<[1], [0], [0], [1], [0, 0, 1, 1], [], []>} : vector<16x128xbf16>, vector<128x128xbf16>, vector<16x128xf32> -> vector<16x128xf32>
    %7 = arith.addf %3, %6 : vector<16x128xf32>
    %c0_6 = arith.constant 0 : index
    %c0_7 = arith.constant 0 : index
    %8 = vector.load %arg7[%c0_6, %c0_7] : memref<16x128xf32, #tpu.memory_space<vmem>>, vector<16x128xf32>
    tpu.vector_store %arg7[%c0_6, %c0_7], %7 {strides = array<i32>} : memref<16x128xf32, #tpu.memory_space<vmem>>, vector<16x128xf32>,
    %c0_i32_8 = arith.constant 0 : i32
    %9 = arith.cmpi eq, %arg2, %c0_i32_8 : i32
    %10 = arith.extui %9 : i1 to i32
    %c0_i32_9 = arith.constant 0 : i32
    %11 = arith.cmpi ne, %10, %c0_i32_9 : i32
    scf.if %11 {
      %c0_10 = arith.constant 0 : index
      %c0_11 = arith.constant 0 : index
      %12 = vector.load %arg7[%c0_10, %c0_11] : memref<16x128xf32, #tpu.memory_space<vmem>>, vector<16x128xf32>
      %c0_12 = arith.constant 0 : index
      %c0_13 = arith.constant 0 : index
      %13 = vector.load %arg5[%c0_12, %c0_13] : memref<1x128xf32, #tpu.memory_space<vmem>>, vector<1x128xf32>
      %14 = vector.broadcast %13 : vector<1x128xf32> to vector<16x128xf32>
      %15 = arith.addf %12, %14 : vector<16x128xf32>
      %c0_14 = arith.constant 0 : index
      %c0_15 = arith.constant 0 : index
      %16 = vector.load %arg6[%c0_14, %c0_15] : memref<16x128xf32, #tpu.memory_space<vmem>>, vector<16x128xf32>
      tpu.vector_store %arg6[%c0_14, %c0_15], %15 {strides = array<i32>} : memref<16x128xf32, #tpu.memory_space<vmem>>, vector<16x128xf32>,
    } else {
    }
    return
  }
  func.func @transform_0(%arg0: i32, %arg1: i32, %arg2: i32) -> (i32, i32) {
    %c0_i32 = arith.constant 0 : i32
    return %arg0, %arg2 : i32, i32
  }
  func.func @transform_1(%arg0: i32, %arg1: i32, %arg2: i32) -> (i32, i32) {
    %c0_i32 = arith.constant 0 : i32
    return %arg2, %arg1 : i32, i32
  }
  func.func @transform_2(%arg0: i32, %arg1: i32, %arg2: i32) -> (i32, i32) {
    %c0_i32 = arith.constant 0 : i32
    %c0_i32_0 = arith.constant 0 : i32
    return %c0_i32, %arg1 : i32, i32
  }
  func.func @transform_3(%arg0: i32, %arg1: i32, %arg2: i32) -> (i32, i32) {
    %c0_i32 = arith.constant 0 : i32
    return %arg0, %arg1 : i32, i32
  }
}

module attributes {stable_mosaic.version = 11 : i64} {
  func.func @_flash_attn_kernel(%arg0: i32, %arg1: i32, %arg2: i32, %arg3: memref<1x8x128xbf16, #tpu.memory_space<vmem>>, %arg4: memref<1x8x128xbf16, #tpu.memory_space<vmem>>, %arg5: memref<1x8x128xbf16, #tpu.memory_space<vmem>>, %arg6: memref<1x8x128xbf16, #tpu.memory_space<vmem>>, %arg7: memref<8x4xf32, #tpu.memory_space<vmem>>, %arg8: memref<8x4xf32, #tpu.memory_space<vmem>>, %arg9: memref<8x128xf32, #tpu.memory_space<vmem>>) attributes {dimension_semantics = [#tpu.dimension_semantics<parallel>, #tpu.dimension_semantics<parallel>, #tpu.dimension_semantics<arbitrary>], iteration_bounds = array<i64: 2, 1, 1>, scalar_prefetch = 0 : i64, scratch_operands = 3 : i64, tpu.core_type = #tpu.core_type<tc>, window_params = [{transform_indices = @transform_0, window_bounds = array<i64: 1, 8, 128>}, {transform_indices = @transform_1, window_bounds = array<i64: 1, 8, 128>}, {transform_indices = @transform_2, window_bounds = array<i64: 1, 8, 128>}, {transform_indices = @transform_3, window_bounds = array<i64: 1, 8, 128>}]} {
    %c0_i32 = arith.constant 0 : i32
    %0 = arith.cmpi eq, %arg2, %c0_i32 : i32
    %1 = arith.extui %0 : i1 to i32
    %c0_i32_0 = arith.constant 0 : i32
    %2 = arith.cmpi ne, %1, %c0_i32_0 : i32
    scf.if %2 {
      %cst_47 = arith.constant 0xFF800000 : f32
      %118 = vector.broadcast %cst_47 : f32 to vector<8x4xf32>
      %c0_48 = arith.constant 0 : index
      %c0_49 = arith.constant 0 : index
      %119 = vector.load %arg7[%c0_48, %c0_49] : memref<8x4xf32, #tpu.memory_space<vmem>>, vector<8x4xf32>
      tpu.vector_store %arg7[%c0_48, %c0_49], %118 {strides = array<i32>} : memref<8x4xf32, #tpu.memory_space<vmem>>, vector<8x4xf32>,
      %cst_50 = arith.constant 0.000000e+00 : f32
      %120 = vector.broadcast %cst_50 : f32 to vector<8x4xf32>
      %c0_51 = arith.constant 0 : index
      %c0_52 = arith.constant 0 : index
      %121 = vector.load %arg8[%c0_51, %c0_52] : memref<8x4xf32, #tpu.memory_space<vmem>>, vector<8x4xf32>
      tpu.vector_store %arg8[%c0_51, %c0_52], %120 {strides = array<i32>} : memref<8x4xf32, #tpu.memory_space<vmem>>, vector<8x4xf32>,
      %cst_53 = arith.constant 0.000000e+00 : f32
      %122 = vector.broadcast %cst_53 : f32 to vector<8x128xf32>
      %c0_54 = arith.constant 0 : index
      %c0_55 = arith.constant 0 : index
      %123 = vector.load %arg9[%c0_54, %c0_55] : memref<8x128xf32, #tpu.memory_space<vmem>>, vector<8x128xf32>
      tpu.vector_store %arg9[%c0_54, %c0_55], %122 {strides = array<i32>} : memref<8x128xf32, #tpu.memory_space<vmem>>, vector<8x128xf32>,
    } else {
    }
    %c0 = arith.constant 0 : index
    %c0_1 = arith.constant 0 : index
    %c0_2 = arith.constant 0 : index
    %3 = vector.load %arg3[%c0, %c0_1, %c0_2] : memref<1x8x128xbf16, #tpu.memory_space<vmem>>, vector<1x8x128xbf16>
    %4 = vector.shape_cast %3 : vector<1x8x128xbf16> to vector<8x128xbf16>
    %c0_3 = arith.constant 0 : index
    %c0_4 = arith.constant 0 : index
    %c0_5 = arith.constant 0 : index
    %5 = vector.load %arg4[%c0_3, %c0_4, %c0_5] : memref<1x8x128xbf16, #tpu.memory_space<vmem>>, vector<1x8x128xbf16>
    %6 = vector.shape_cast %5 : vector<1x8x128xbf16> to vector<8x128xbf16>
    %c0_6 = arith.constant 0 : index
    %c0_7 = arith.constant 0 : index
    %c0_8 = arith.constant 0 : index
    %7 = vector.load %arg5[%c0_6, %c0_7, %c0_8] : memref<1x8x128xbf16, #tpu.memory_space<vmem>>, vector<1x8x128xbf16>
    %8 = vector.shape_cast %7 : vector<1x8x128xbf16> to vector<8x128xbf16>
    %c0_9 = arith.constant 0 : index
    %c0_10 = arith.constant 0 : index
    %9 = vector.load %arg7[%c0_9, %c0_10] : memref<8x4xf32, #tpu.memory_space<vmem>>, vector<8x4xf32>
    %c0_11 = arith.constant 0 : index
    %c0_12 = arith.constant 0 : index
    %10 = vector.load %arg8[%c0_11, %c0_12] : memref<8x4xf32, #tpu.memory_space<vmem>>, vector<8x4xf32>
    %11 = vector.extract_strided_slice %4 {offsets = [0, 0], sizes = [8, 32], strides = [1, 1]} : vector<8x128xbf16> to vector<8x32xbf16>
    %12 = vector.extract_strided_slice %6 {offsets = [0, 0], sizes = [8, 32], strides = [1, 1]} : vector<8x128xbf16> to vector<8x32xbf16>
    %13 = vector.extract_strided_slice %8 {offsets = [0, 0], sizes = [8, 32], strides = [1, 1]} : vector<8x128xbf16> to vector<8x32xbf16>
    %cst = arith.constant dense<0.000000e+00> : vector<8x8xf32>
    %14 = tpu.matmul %11, %12, %cst {dimension_numbers = #tpu.dot_dimension_numbers<[1], [1], [0], [0], [0, 0, 1, 0], [], []>} : vector<8x32xbf16>, vector<8x32xbf16>, vector<8x8xf32> -> vector<8x8xf32>
    %15 = vector.extract_strided_slice %9 {offsets = [0, 0], sizes = [8, 1], strides = [1, 1]} : vector<8x4xf32> to vector<8x1xf32>
    %cst_13 = arith.constant dense<0xFF800000> : vector<8xf32>
    %16 = vector.multi_reduction <maximumf>, %14, %cst_13 [1] : vector<8x8xf32> to vector<8xf32>
    %17 = vector.shape_cast %16 : vector<8xf32> to vector<8x1xf32>
    %18 = arith.maximumf %15, %17 : vector<8x1xf32>
    %19 = arith.subf %15, %18 : vector<8x1xf32>
    %20 = math.exp %19 : vector<8x1xf32>
    %21 = vector.broadcast %18 : vector<8x1xf32> to vector<8x8xf32>
    %22 = arith.subf %14, %21 : vector<8x8xf32>
    %23 = math.exp %22 : vector<8x8xf32>
    %24 = vector.extract_strided_slice %10 {offsets = [0, 0], sizes = [8, 1], strides = [1, 1]} : vector<8x4xf32> to vector<8x1xf32>
    %25 = arith.mulf %20, %24 : vector<8x1xf32>
    %cst_14 = arith.constant dense<0.000000e+00> : vector<8xf32>
    %26 = vector.multi_reduction <add>, %23, %cst_14 [1] : vector<8x8xf32> to vector<8xf32>
    %27 = vector.shape_cast %26 : vector<8xf32> to vector<8x1xf32>
    %28 = arith.addf %25, %27 : vector<8x1xf32>
    %c0_15 = arith.constant 0 : index
    %c0_16 = arith.constant 0 : index
    %29 = vector.load %arg9[%c0_15, %c0_16] : memref<8x128xf32, #tpu.memory_space<vmem>>, vector<8x32xf32>
    %30 = vector.broadcast %20 : vector<8x1xf32> to vector<8x32xf32>
    %31 = arith.mulf %30, %29 : vector<8x32xf32>
    %32 = arith.truncf %23 : vector<8x8xf32> to vector<8x8xbf16>
    %cst_17 = arith.constant dense<0.000000e+00> : vector<8x32xf32>
    %33 = tpu.matmul %32, %13, %cst_17 {dimension_numbers = #tpu.dot_dimension_numbers<[1], [0], [0], [1], [0, 0, 1, 1], [], []>} : vector<8x8xbf16>, vector<8x32xbf16>, vector<8x32xf32> -> vector<8x32xf32>
    %34 = arith.addf %31, %33 : vector<8x32xf32>
    %c0_18 = arith.constant 0 : index
    %c0_19 = arith.constant 0 : index
    %35 = vector.load %arg9[%c0_18, %c0_19] : memref<8x128xf32, #tpu.memory_space<vmem>>, vector<8x32xf32>
    tpu.vector_store %arg9[%c0_18, %c0_19], %34 {strides = array<i32>} : memref<8x128xf32, #tpu.memory_space<vmem>>, vector<8x32xf32>,
    %36 = vector.extract_strided_slice %4 {offsets = [0, 32], sizes = [8, 32], strides = [1, 1]} : vector<8x128xbf16> to vector<8x32xbf16>
    %37 = vector.extract_strided_slice %6 {offsets = [0, 32], sizes = [8, 32], strides = [1, 1]} : vector<8x128xbf16> to vector<8x32xbf16>
    %38 = vector.extract_strided_slice %8 {offsets = [0, 32], sizes = [8, 32], strides = [1, 1]} : vector<8x128xbf16> to vector<8x32xbf16>
    %cst_20 = arith.constant dense<0.000000e+00> : vector<8x8xf32>
    %39 = tpu.matmul %36, %37, %cst_20 {dimension_numbers = #tpu.dot_dimension_numbers<[1], [1], [0], [0], [0, 0, 1, 0], [], []>} : vector<8x32xbf16>, vector<8x32xbf16>, vector<8x8xf32> -> vector<8x8xf32>
    %40 = vector.extract_strided_slice %9 {offsets = [0, 1], sizes = [8, 1], strides = [1, 1]} : vector<8x4xf32> to vector<8x1xf32>
    %cst_21 = arith.constant dense<0xFF800000> : vector<8xf32>
    %41 = vector.multi_reduction <maximumf>, %39, %cst_21 [1] : vector<8x8xf32> to vector<8xf32>
    %42 = vector.shape_cast %41 : vector<8xf32> to vector<8x1xf32>
    %43 = arith.maximumf %40, %42 : vector<8x1xf32>
    %44 = arith.subf %40, %43 : vector<8x1xf32>
    %45 = math.exp %44 : vector<8x1xf32>
    %46 = vector.broadcast %43 : vector<8x1xf32> to vector<8x8xf32>
    %47 = arith.subf %39, %46 : vector<8x8xf32>
    %48 = math.exp %47 : vector<8x8xf32>
    %49 = vector.extract_strided_slice %10 {offsets = [0, 1], sizes = [8, 1], strides = [1, 1]} : vector<8x4xf32> to vector<8x1xf32>
    %50 = arith.mulf %45, %49 : vector<8x1xf32>
    %cst_22 = arith.constant dense<0.000000e+00> : vector<8xf32>
    %51 = vector.multi_reduction <add>, %48, %cst_22 [1] : vector<8x8xf32> to vector<8xf32>
    %52 = vector.shape_cast %51 : vector<8xf32> to vector<8x1xf32>
    %53 = arith.addf %50, %52 : vector<8x1xf32>
    %c0_23 = arith.constant 0 : index
    %c32 = arith.constant 32 : index
    %54 = vector.load %arg9[%c0_23, %c32] : memref<8x128xf32, #tpu.memory_space<vmem>>, vector<8x32xf32>
    %55 = vector.broadcast %45 : vector<8x1xf32> to vector<8x32xf32>
    %56 = arith.mulf %55, %54 : vector<8x32xf32>
    %57 = arith.truncf %48 : vector<8x8xf32> to vector<8x8xbf16>
    %cst_24 = arith.constant dense<0.000000e+00> : vector<8x32xf32>
    %58 = tpu.matmul %57, %38, %cst_24 {dimension_numbers = #tpu.dot_dimension_numbers<[1], [0], [0], [1], [0, 0, 1, 1], [], []>} : vector<8x8xbf16>, vector<8x32xbf16>, vector<8x32xf32> -> vector<8x32xf32>
    %59 = arith.addf %56, %58 : vector<8x32xf32>
    %c0_25 = arith.constant 0 : index
    %c32_26 = arith.constant 32 : index
    %60 = vector.load %arg9[%c0_25, %c32_26] : memref<8x128xf32, #tpu.memory_space<vmem>>, vector<8x32xf32>
    tpu.vector_store %arg9[%c0_25, %c32_26], %59 {strides = array<i32>} : memref<8x128xf32, #tpu.memory_space<vmem>>, vector<8x32xf32>,
    %61 = vector.extract_strided_slice %4 {offsets = [0, 64], sizes = [8, 32], strides = [1, 1]} : vector<8x128xbf16> to vector<8x32xbf16>
    %62 = vector.extract_strided_slice %6 {offsets = [0, 64], sizes = [8, 32], strides = [1, 1]} : vector<8x128xbf16> to vector<8x32xbf16>
    %63 = vector.extract_strided_slice %8 {offsets = [0, 64], sizes = [8, 32], strides = [1, 1]} : vector<8x128xbf16> to vector<8x32xbf16>
    %cst_27 = arith.constant dense<0.000000e+00> : vector<8x8xf32>
    %64 = tpu.matmul %61, %62, %cst_27 {dimension_numbers = #tpu.dot_dimension_numbers<[1], [1], [0], [0], [0, 0, 1, 0], [], []>} : vector<8x32xbf16>, vector<8x32xbf16>, vector<8x8xf32> -> vector<8x8xf32>
    %65 = vector.extract_strided_slice %9 {offsets = [0, 2], sizes = [8, 1], strides = [1, 1]} : vector<8x4xf32> to vector<8x1xf32>
    %cst_28 = arith.constant dense<0xFF800000> : vector<8xf32>
    %66 = vector.multi_reduction <maximumf>, %64, %cst_28 [1] : vector<8x8xf32> to vector<8xf32>
    %67 = vector.shape_cast %66 : vector<8xf32> to vector<8x1xf32>
    %68 = arith.maximumf %65, %67 : vector<8x1xf32>
    %69 = arith.subf %65, %68 : vector<8x1xf32>
    %70 = math.exp %69 : vector<8x1xf32>
    %71 = vector.broadcast %68 : vector<8x1xf32> to vector<8x8xf32>
    %72 = arith.subf %64, %71 : vector<8x8xf32>
    %73 = math.exp %72 : vector<8x8xf32>
    %74 = vector.extract_strided_slice %10 {offsets = [0, 2], sizes = [8, 1], strides = [1, 1]} : vector<8x4xf32> to vector<8x1xf32>
    %75 = arith.mulf %70, %74 : vector<8x1xf32>
    %cst_29 = arith.constant dense<0.000000e+00> : vector<8xf32>
    %76 = vector.multi_reduction <add>, %73, %cst_29 [1] : vector<8x8xf32> to vector<8xf32>
    %77 = vector.shape_cast %76 : vector<8xf32> to vector<8x1xf32>
    %78 = arith.addf %75, %77 : vector<8x1xf32>
    %c0_30 = arith.constant 0 : index
    %c64 = arith.constant 64 : index
    %79 = vector.load %arg9[%c0_30, %c64] : memref<8x128xf32, #tpu.memory_space<vmem>>, vector<8x32xf32>
    %80 = vector.broadcast %70 : vector<8x1xf32> to vector<8x32xf32>
    %81 = arith.mulf %80, %79 : vector<8x32xf32>
    %82 = arith.truncf %73 : vector<8x8xf32> to vector<8x8xbf16>
    %cst_31 = arith.constant dense<0.000000e+00> : vector<8x32xf32>
    %83 = tpu.matmul %82, %63, %cst_31 {dimension_numbers = #tpu.dot_dimension_numbers<[1], [0], [0], [1], [0, 0, 1, 1], [], []>} : vector<8x8xbf16>, vector<8x32xbf16>, vector<8x32xf32> -> vector<8x32xf32>
    %84 = arith.addf %81, %83 : vector<8x32xf32>
    %c0_32 = arith.constant 0 : index
    %c64_33 = arith.constant 64 : index
    %85 = vector.load %arg9[%c0_32, %c64_33] : memref<8x128xf32, #tpu.memory_space<vmem>>, vector<8x32xf32>
    tpu.vector_store %arg9[%c0_32, %c64_33], %84 {strides = array<i32>} : memref<8x128xf32, #tpu.memory_space<vmem>>, vector<8x32xf32>,
    %86 = vector.extract_strided_slice %4 {offsets = [0, 96], sizes = [8, 32], strides = [1, 1]} : vector<8x128xbf16> to vector<8x32xbf16>
    %87 = vector.extract_strided_slice %6 {offsets = [0, 96], sizes = [8, 32], strides = [1, 1]} : vector<8x128xbf16> to vector<8x32xbf16>
    %88 = vector.extract_strided_slice %8 {offsets = [0, 96], sizes = [8, 32], strides = [1, 1]} : vector<8x128xbf16> to vector<8x32xbf16>
    %cst_34 = arith.constant dense<0.000000e+00> : vector<8x8xf32>
    %89 = tpu.matmul %86, %87, %cst_34 {dimension_numbers = #tpu.dot_dimension_numbers<[1], [1], [0], [0], [0, 0, 1, 0], [], []>} : vector<8x32xbf16>, vector<8x32xbf16>, vector<8x8xf32> -> vector<8x8xf32>
    %90 = vector.extract_strided_slice %9 {offsets = [0, 3], sizes = [8, 1], strides = [1, 1]} : vector<8x4xf32> to vector<8x1xf32>
    %cst_35 = arith.constant dense<0xFF800000> : vector<8xf32>
    %91 = vector.multi_reduction <maximumf>, %89, %cst_35 [1] : vector<8x8xf32> to vector<8xf32>
    %92 = vector.shape_cast %91 : vector<8xf32> to vector<8x1xf32>
    %93 = arith.maximumf %90, %92 : vector<8x1xf32>
    %94 = arith.subf %90, %93 : vector<8x1xf32>
    %95 = math.exp %94 : vector<8x1xf32>
    %96 = vector.broadcast %93 : vector<8x1xf32> to vector<8x8xf32>
    %97 = arith.subf %89, %96 : vector<8x8xf32>
    %98 = math.exp %97 : vector<8x8xf32>
    %99 = vector.extract_strided_slice %10 {offsets = [0, 3], sizes = [8, 1], strides = [1, 1]} : vector<8x4xf32> to vector<8x1xf32>
    %100 = arith.mulf %95, %99 : vector<8x1xf32>
    %cst_36 = arith.constant dense<0.000000e+00> : vector<8xf32>
    %101 = vector.multi_reduction <add>, %98, %cst_36 [1] : vector<8x8xf32> to vector<8xf32>
    %102 = vector.shape_cast %101 : vector<8xf32> to vector<8x1xf32>
    %103 = arith.addf %100, %102 : vector<8x1xf32>
    %c0_37 = arith.constant 0 : index
    %c96 = arith.constant 96 : index
    %104 = vector.load %arg9[%c0_37, %c96] : memref<8x128xf32, #tpu.memory_space<vmem>>, vector<8x32xf32>
    %105 = vector.broadcast %95 : vector<8x1xf32> to vector<8x32xf32>
    %106 = arith.mulf %105, %104 : vector<8x32xf32>
    %107 = arith.truncf %98 : vector<8x8xf32> to vector<8x8xbf16>
    %cst_38 = arith.constant dense<0.000000e+00> : vector<8x32xf32>
    %108 = tpu.matmul %107, %88, %cst_38 {dimension_numbers = #tpu.dot_dimension_numbers<[1], [0], [0], [1], [0, 0, 1, 1], [], []>} : vector<8x8xbf16>, vector<8x32xbf16>, vector<8x32xf32> -> vector<8x32xf32>
    %109 = arith.addf %106, %108 : vector<8x32xf32>
    %c0_39 = arith.constant 0 : index
    %c96_40 = arith.constant 96 : index
    %110 = vector.load %arg9[%c0_39, %c96_40] : memref<8x128xf32, #tpu.memory_space<vmem>>, vector<8x32xf32>
    tpu.vector_store %arg9[%c0_39, %c96_40], %109 {strides = array<i32>} : memref<8x128xf32, #tpu.memory_space<vmem>>, vector<8x32xf32>,
    %111 = tpu.concatenate %18, %43, %68, %93 in 1 : vector<8x1xf32>, vector<8x1xf32>, vector<8x1xf32>, vector<8x1xf32> -> vector<8x4xf32>
    %c0_41 = arith.constant 0 : index
    %c0_42 = arith.constant 0 : index
    %112 = vector.load %arg7[%c0_41, %c0_42] : memref<8x4xf32, #tpu.memory_space<vmem>>, vector<8x4xf32>
    tpu.vector_store %arg7[%c0_41, %c0_42], %111 {strides = array<i32>} : memref<8x4xf32, #tpu.memory_space<vmem>>, vector<8x4xf32>,
    %113 = tpu.concatenate %28, %53, %78, %103 in 1 : vector<8x1xf32>, vector<8x1xf32>, vector<8x1xf32>, vector<8x1xf32> -> vector<8x4xf32>
    %c0_43 = arith.constant 0 : index
    %c0_44 = arith.constant 0 : index
    %114 = vector.load %arg8[%c0_43, %c0_44] : memref<8x4xf32, #tpu.memory_space<vmem>>, vector<8x4xf32>
    tpu.vector_store %arg8[%c0_43, %c0_44], %113 {strides = array<i32>} : memref<8x4xf32, #tpu.memory_space<vmem>>, vector<8x4xf32>,
    %c0_i32_45 = arith.constant 0 : i32
    %115 = arith.cmpi eq, %arg2, %c0_i32_45 : i32
    %116 = arith.extui %115 : i1 to i32
    %c0_i32_46 = arith.constant 0 : i32
    %117 = arith.cmpi ne, %116, %c0_i32_46 : i32
    scf.if %117 {
      %c0_47 = arith.constant 0 : index
      %c0_48 = arith.constant 0 : index
      %118 = vector.load %arg8[%c0_47, %c0_48] : memref<8x4xf32, #tpu.memory_space<vmem>>, vector<8x4xf32>
      %119 = tpu.reciprocal %118 {approx = true} : vector<8x4xf32> -> vector<8x4xf32>
      %c0_49 = arith.constant 0 : index
      %c0_50 = arith.constant 0 : index
      %120 = vector.load %arg9[%c0_49, %c0_50] : memref<8x128xf32, #tpu.memory_space<vmem>>, vector<8x32xf32>
      %121 = vector.extract_strided_slice %119 {offsets = [0, 0], sizes = [8, 1], strides = [1, 1]} : vector<8x4xf32> to vector<8x1xf32>
      %122 = vector.broadcast %121 : vector<8x1xf32> to vector<8x32xf32>
      %123 = arith.mulf %120, %122 : vector<8x32xf32>
      %c0_51 = arith.constant 0 : index
      %c32_52 = arith.constant 32 : index
      %124 = vector.load %arg9[%c0_51, %c32_52] : memref<8x128xf32, #tpu.memory_space<vmem>>, vector<8x32xf32>
      %125 = vector.extract_strided_slice %119 {offsets = [0, 1], sizes = [8, 1], strides = [1, 1]} : vector<8x4xf32> to vector<8x1xf32>
      %126 = vector.broadcast %125 : vector<8x1xf32> to vector<8x32xf32>
      %127 = arith.mulf %124, %126 : vector<8x32xf32>
      %c0_53 = arith.constant 0 : index
      %c64_54 = arith.constant 64 : index
      %128 = vector.load %arg9[%c0_53, %c64_54] : memref<8x128xf32, #tpu.memory_space<vmem>>, vector<8x32xf32>
      %129 = vector.extract_strided_slice %119 {offsets = [0, 2], sizes = [8, 1], strides = [1, 1]} : vector<8x4xf32> to vector<8x1xf32>
      %130 = vector.broadcast %129 : vector<8x1xf32> to vector<8x32xf32>
      %131 = arith.mulf %128, %130 : vector<8x32xf32>
      %c0_55 = arith.constant 0 : index
      %c96_56 = arith.constant 96 : index
      %132 = vector.load %arg9[%c0_55, %c96_56] : memref<8x128xf32, #tpu.memory_space<vmem>>, vector<8x32xf32>
      %133 = vector.extract_strided_slice %119 {offsets = [0, 3], sizes = [8, 1], strides = [1, 1]} : vector<8x4xf32> to vector<8x1xf32>
      %134 = vector.broadcast %133 : vector<8x1xf32> to vector<8x32xf32>
      %135 = arith.mulf %132, %134 : vector<8x32xf32>
      %136 = tpu.concatenate %123, %127, %131, %135 in 1 : vector<8x32xf32>, vector<8x32xf32>, vector<8x32xf32>, vector<8x32xf32> -> vector<8x128xf32>
      %137 = arith.truncf %136 : vector<8x128xf32> to vector<8x128xbf16>
      %c0_57 = arith.constant 0 : index
      %c0_58 = arith.constant 0 : index
      %c0_59 = arith.constant 0 : index
      %138 = vector.load %arg6[%c0_57, %c0_58, %c0_59] : memref<1x8x128xbf16, #tpu.memory_space<vmem>>, vector<1x8x128xbf16>
      %139 = vector.shape_cast %138 : vector<1x8x128xbf16> to vector<8x128xbf16>
      %140 = vector.shape_cast %137 : vector<8x128xbf16> to vector<1x8x128xbf16>
      tpu.vector_store %arg6[%c0_57, %c0_58, %c0_59], %140 {strides = array<i32>} : memref<1x8x128xbf16, #tpu.memory_space<vmem>>, vector<1x8x128xbf16>,
    } else {
    }
    return
  }
  func.func @transform_0(%arg0: i32, %arg1: i32, %arg2: i32) -> (i32, i32, i32) {
    %c0_i32 = arith.constant 0 : i32
    %c0_i32_0 = arith.constant 0 : i32
    return %arg0, %arg1, %c0_i32 : i32, i32, i32
  }
  func.func @transform_1(%arg0: i32, %arg1: i32, %arg2: i32) -> (i32, i32, i32) {
    %c1_i32 = arith.constant 1 : i32
    %c0_i32 = arith.constant 0 : i32
    return %arg0, %arg2, %c1_i32 : i32, i32, i32
  }
  func.func @transform_2(%arg0: i32, %arg1: i32, %arg2: i32) -> (i32, i32, i32) {
    %c2_i32 = arith.constant 2 : i32
    %c0_i32 = arith.constant 0 : i32
    return %arg0, %arg2, %c2_i32 : i32, i32, i32
  }
  func.func @transform_3(%arg0: i32, %arg1: i32, %arg2: i32) -> (i32, i32, i32) {
    %c0_i32 = arith.constant 0 : i32
    %c0_i32_0 = arith.constant 0 : i32
    return %arg0, %arg1, %c0_i32 : i32, i32, i32
  }
}

</mosaic_0001>

<llo_original>
// kernel: mha_lora_forward.5
$region0: #{mha_lora_forward.5}
  #allocation0 [shape = 'u32[]', space=smem, size = 0x4, offset = 0x4, fixed_abs, tag = 'smem constant byte address 0x4 - core index']
  #allocation1 [shape = 'u32[144,128]{1,0:T(1,128)}', space=vmem, size = 0x12000, scoped, tag = 'internal scratch']
  #allocation2 [shape = 'f32[16,128]{1,0:T(8,128)}', space=vmem, size = 0x2000, scoped, tag = 'scratch operand']
  %s0 = inlined_call_operand.vmem [shape: bf16[16,128], index: 0, kind: input, shape index: {}]
  %s1 = inlined_call_operand.vmem [shape: bf16[128,128], index: 1, kind: input, shape index: {}]
  %s2 = inlined_call_operand.vmem [shape: f32[1,128], index: 2, kind: input, shape index: {}]
  %s3 = inlined_call_operand.hbm [shape: f32[16,128], index: 3, kind: output, shape index: {}]
  %s4 = sld [smem:[#allocation0]]
  $region30: #{mha_lora_forward.5} parent=0
    _
  %s6 = ssub.s32 1, %s4
  %s7 = scalar_select 0, %s6, %s4
  $region1: #{mha_lora_forward.5} parent=0
    #allocation3 [shape = 'u8[8192]{0}', space=vmem, size = 0x2000, scoped, tag = 'output window, operand 0, single buffered']
    #allocation4 [shape = 's32[1]{0}', space=sflag, size = 0x4, scoped, tag = 'scoped memory for mha_lora_forward.5']
    %8 = vsyncpa [#allocation4], 0
    // Predicated region
    $region2: #{mha_lora_forward.5} parent=1 // pred_check
      _
    $region3: #{mha_lora_forward.5} parent=1 // pred_check_branch
      %10 = sbr.rel (0) target = $region5
    $region4: #{mha_lora_forward.5} parent=1 // pred_region
      _
    $region5: #{mha_lora_forward.5} parent=1 // pred_fallthru
      _
    // Predicated region
    $region6: #{mha_lora_forward.5} parent=1 // pred_check
      _
    $region7: #{mha_lora_forward.5} parent=1 // pred_check_branch
      %12 = sbr.rel (0) target = $region9
    $region8: #{mha_lora_forward.5} parent=1 // pred_region
      _
    $region9: #{mha_lora_forward.5} parent=1 // pred_fallthru
      _
    // Predicated region
    $region10: #{mha_lora_forward.5} parent=1 // pred_check
      _
    $region11: #{mha_lora_forward.5} parent=1 // pred_check_branch
      %14 = sbr.rel (0) target = $region13
    $region12: #{mha_lora_forward.5} parent=1 // pred_region
      _
    $region13: #{mha_lora_forward.5} parent=1 // pred_fallthru
      _
    %p16 = scmp.eq.s32.totalorder 0, 0
    // Predicated region
    $region14: #{mha_lora_forward.5} parent=1 // pred_check
      %p17 = pneg %p16
    $region15: #{mha_lora_forward.5} parent=1 // pred_check_branch
      %19 = sbr.rel (%p17) target = $region17
    $region16: #{mha_lora_forward.5} parent=1 // pred_region
      %20 = vst [vmem:[#allocation2] sm:$0xff] 0.0
      %21 = vst [vmem:[#allocation2 + $0x8] sm:$0xff] 0.0
    $region17: #{mha_lora_forward.5} parent=1 // pred_fallthru
      _
    %v22 = vld [vmem:[#allocation2] sm:$0xff]
    %v23 = vld [vmem:[#allocation2 + $0x8] sm:$0xff]
    %v24 = vld [vmem:[%s0] sm:$0xf]
    %v25 = vld [vmem:[%s0 + $0x4] sm:$0xf]
    %v26 = vld [vmem:[%s1] sm:$0xf]
    %v27 = vld [vmem:[%s1 + $0x4] sm:$0xf]
    %v28 = vld [vmem:[%s1 + $0x8] sm:$0xf]
    %v29 = vld [vmem:[%s1 + $0xc] sm:$0xf]
    %v30 = vld [vmem:[%s1 + $0x10] sm:$0xf]
    %v31 = vld [vmem:[%s1 + $0x14] sm:$0xf]
    %v32 = vld [vmem:[%s1 + $0x18] sm:$0xf]
    %v33 = vld [vmem:[%s1 + $0x1c] sm:$0xf]
    %v34 = vld [vmem:[%s1 + $0x20] sm:$0xf]
    %v35 = vld [vmem:[%s1 + $0x24] sm:$0xf]
    %v36 = vld [vmem:[%s1 + $0x28] sm:$0xf]
    %v37 = vld [vmem:[%s1 + $0x2c] sm:$0xf]
    %v38 = vld [vmem:[%s1 + $0x30] sm:$0xf]
    %v39 = vld [vmem:[%s1 + $0x34] sm:$0xf]
    %v40 = vld [vmem:[%s1 + $0x38] sm:$0xf]
    %v41 = vld [vmem:[%s1 + $0x3c] sm:$0xf]
    %v44 = vunpack.c.l.b16 %v24
    %v45 = vunpack.c.l.b16 %v25
    %v46 = vpack.c.b16 %v45, %v44
    %v64 = vunpack.c.l.b16 %v26
    %v65 = vunpack.c.l.b16 %v27
    %v66 = vunpack.c.l.b16 %v28
    %v67 = vunpack.c.l.b16 %v29
    %v68 = vunpack.c.l.b16 %v30
    %v69 = vunpack.c.l.b16 %v31
    %v70 = vunpack.c.l.b16 %v32
    %v71 = vunpack.c.l.b16 %v33
    %v72 = vunpack.c.l.b16 %v34
    %v73 = vunpack.c.l.b16 %v35
    %v74 = vunpack.c.l.b16 %v36
    %v75 = vunpack.c.l.b16 %v37
    %v76 = vunpack.c.l.b16 %v38
    %v77 = vunpack.c.l.b16 %v39
    %v78 = vunpack.c.l.b16 %v40
    %v79 = vunpack.c.l.b16 %v41
    %v80 = vpack.c.b16 %v65, %v64
    %v81 = vpack.c.b16 %v67, %v66
    %v82 = vpack.c.b16 %v69, %v68
    %v83 = vpack.c.b16 %v71, %v70
    %v84 = vpack.c.b16 %v73, %v72
    %v85 = vpack.c.b16 %v75, %v74
    %v86 = vpack.c.b16 %v77, %v76
    %v87 = vpack.c.b16 %v79, %v78
    %96 = vmatprep.subr.bf16.mxu0 0
    %97 = vmatpush1.bf16.msra.mxu0 %v87
    %98 = vmatprep.subr.bf16.mxu0 0
    %99 = vmatpush1.bf16.msra.mxu0 %v86
    %100 = vmatprep.subr.bf16.mxu0 0
    %101 = vmatpush1.bf16.msra.mxu0 %v85
    %102 = vmatprep.subr.bf16.mxu0 0
    %103 = vmatpush1.bf16.msra.mxu0 %v84
    %104 = vmatprep.subr.bf16.mxu0 0
    %105 = vmatpush1.bf16.msra.mxu0 %v83
    %106 = vmatprep.subr.bf16.mxu0 0
    %107 = vmatpush1.bf16.msra.mxu0 %v82
    %108 = vmatprep.subr.bf16.mxu0 0
    %109 = vmatpush1.bf16.msra.mxu0 %v81
    %110 = vmatprep.subr.bf16.mxu0 0
    %111 = vmatpush1.bf16.msra.mxu0 %v80
    %112 = vmatprep.subr.bf16.mxu0 0
    %113 = vmatpush2.bf16.msra.mxu0 0
    %114 = vmatprep.subr.bf16.mxu0 0
    %115 = vmatpush2.bf16.msra.mxu0 0
    %116 = vmatprep.subr.bf16.mxu0 0
    %117 = vmatpush2.bf16.msra.mxu0 0
    %118 = vmatprep.subr.bf16.mxu0 0
    %119 = vmatpush2.bf16.msra.mxu0 0
    %120 = vmatprep.subr.bf16.mxu0 0
    %121 = vmatpush2.bf16.msra.mxu0 0
    %122 = vmatprep.subr.bf16.mxu0 0
    %123 = vmatpush2.bf16.msra.mxu0 0
    %124 = vmatprep.subr.bf16.mxu0 0
    %125 = vmatpush2.bf16.msra.mxu0 0
    %126 = vmatprep.subr.bf16.mxu0 0
    %127 = vmatpush2.bf16.msra.mxu0 0
    %128 = vmatprep.mubr.bf16.mxu0 0
    %129 = vmatmul.mubr.bf16.gmra.mxu0 %v46
    %v130 = vpop.f32.mrf.mxu0
    %v131 = vadd.f32 0.0, %v130
    %v132 = vpop.f32.mrf.mxu0
    %v133 = vpop.f32.mrf.mxu0
    %v134 = vadd.f32 0.0, %v133
    %v135 = vpop.f32.mrf.mxu0
    %136 = vdwg.mxu0
    %v137 = vadd.f32 %v22, %v131
    %v138 = vadd.f32 %v23, %v134
    %139 = vst [vmem:[#allocation2] sm:$0xff] %v137
    %140 = vst [vmem:[#allocation2 + $0x8] sm:$0xff] %v138
    // Predicated region
    $region18: #{mha_lora_forward.5} parent=1 // pred_check
      %p141 = pneg %p16
    $region19: #{mha_lora_forward.5} parent=1 // pred_check_branch
      %143 = sbr.rel (%p141) target = $region21
    $region20: #{mha_lora_forward.5} parent=1 // pred_region
      %v144 = vld [vmem:[#allocation2] sm:$0xff]
      %v145 = vld [vmem:[#allocation2 + $0x8] sm:$0xff]
      %v146 = vld [vmem:[%s2] sm:$0x1]
      %v148 = vlaneseq
      %v149 = vshrl.u32 %v148, 7
      %v150 = vsub.s32 0, %v149
      %v151 = vrot.slane %v146, %v150
      %v153 = vadd.f32 %v144, %v151
      %v154 = vadd.f32 %v145, %v151
      %155 = vst [vmem:[#allocation3] sm:$0xff] %v153
      %156 = vst [vmem:[#allocation3 + $0x8] sm:$0xff] %v154
    $region21: #{mha_lora_forward.5} parent=1 // pred_fallthru
      _
    // Predicated region
    $region22: #{mha_lora_forward.5} parent=1 // pred_check
      _
    $region23: #{mha_lora_forward.5} parent=1 // pred_check_branch
      %158 = sbr.rel (0) target = $region25
    $region24: #{mha_lora_forward.5} parent=1 // pred_region
      %s160 = ssub.s32 256, 256
      %161 = vsyncadd [#allocation4], %s160
      %s162 = sshll.u32 [#allocation3], 4
      %s163 = int_to_ptr.vmem [resolvable:$true] %s162
      %168 = dma.vmem_to_hbm [thread:$0]  %s163, 256, %s3, [#allocation4], 128, 128, 8
    $region25: #{mha_lora_forward.5} parent=1 // pred_fallthru
      _
    // Predicated region
    $region26: #{mha_lora_forward.5} parent=1 // pred_check
      _
    $region27: #{mha_lora_forward.5} parent=1 // pred_check_branch
      %170 = sbr.rel (0) target = $region29
    $region28: #{mha_lora_forward.5} parent=1 // pred_region
      %171 = dma.done [#allocation4], 256
    $region29: #{mha_lora_forward.5} parent=1 // pred_fallthru
      _
    %172 = vsyncpa [#allocation4], 1

// kernel: mha_lora_forward.3
$region0: #{mha_lora_forward.3}
  #allocation0 [shape = 'u32[]', space=smem, size = 0x4, offset = 0x4, fixed_abs, tag = 'smem constant byte address 0x4 - core index']
  #allocation1 [shape = 'u32[144,128]{1,0:T(1,128)}', space=vmem, size = 0x12000, scoped, tag = 'internal scratch']
  #allocation2 [shape = 'f32[16,384]{1,0:T(8,128)}', space=vmem, size = 0x6000, scoped, tag = 'scratch operand']
  %s0 = inlined_call_operand.vmem [shape: f32[16,128], index: 0, kind: input, shape index: {}]
  %s1 = inlined_call_operand.hbm [shape: bf16[128,384], index: 1, kind: input, shape index: {}]
  %s2 = inlined_call_operand.vmem [shape: f32[1,384], index: 2, kind: input, shape index: {}]
  %s3 = inlined_call_operand.vmem [shape: bf16[16,384], index: 3, kind: output, shape index: {}]
  %s4 = sld [smem:[#allocation0]]
  $region34: #{mha_lora_forward.3} parent=0
    _
  %s6 = ssub.s32 1, %s4
  %s7 = scalar_select 0, %s6, %s4
  $region1: #{mha_lora_forward.3} parent=0
    #allocation3 [shape = 'u8[98304]{0}', space=vmem, size = 0x18000, scoped, tag = 'input window, operand 1, single buffered']
    #allocation4 [shape = 's32[1]{0}', space=sflag, size = 0x4, scoped, tag = 'scoped memory for mha_lora_forward.3']
    %8 = vsyncpa [#allocation4], 0
    // Predicated region
    $region2: #{mha_lora_forward.3} parent=1 // pred_check
      _
    $region3: #{mha_lora_forward.3} parent=1 // pred_check_branch
      %10 = sbr.rel (0) target = $region5
    $region4: #{mha_lora_forward.3} parent=1 // pred_region
      _
    $region5: #{mha_lora_forward.3} parent=1 // pred_fallthru
      _
    // Predicated region
    $region6: #{mha_lora_forward.3} parent=1 // pred_check
      _
    $region7: #{mha_lora_forward.3} parent=1 // pred_check_branch
      %12 = sbr.rel (0) target = $region9
    $region8: #{mha_lora_forward.3} parent=1 // pred_region
      %s14 = ssub.s32 3072, 3072
      %15 = vsyncadd [#allocation4], %s14
      %s16 = sshll.u32 [#allocation3], 4
      %s17 = int_to_ptr.vmem [resolvable:$true] %s16
      %22 = dma.hbm_to_vmem [thread:$0]  %s1, 3072, %s17, [#allocation4], 192, 192, 12
    $region9: #{mha_lora_forward.3} parent=1 // pred_fallthru
      _
    // Predicated region
    $region10: #{mha_lora_forward.3} parent=1 // pred_check
      _
    $region11: #{mha_lora_forward.3} parent=1 // pred_check_branch
      %24 = sbr.rel (0) target = $region13
    $region12: #{mha_lora_forward.3} parent=1 // pred_region
      _
    $region13: #{mha_lora_forward.3} parent=1 // pred_fallthru
      _
    // Predicated region
    $region14: #{mha_lora_forward.3} parent=1 // pred_check
      _
    $region15: #{mha_lora_forward.3} parent=1 // pred_check_branch
      %26 = sbr.rel (0) target = $region17
    $region16: #{mha_lora_forward.3} parent=1 // pred_region
      %27 = dma.done [#allocation4], 3072
    $region17: #{mha_lora_forward.3} parent=1 // pred_fallthru
      _
    %p29 = scmp.eq.s32.totalorder 0, 0
    // Predicated region
    $region18: #{mha_lora_forward.3} parent=1 // pred_check
      %p30 = pneg %p29
    $region19: #{mha_lora_forward.3} parent=1 // pred_check_branch
      %32 = sbr.rel (%p30) target = $region21
    $region20: #{mha_lora_forward.3} parent=1 // pred_region
      %33 = vst [vmem:[#allocation2] sm:$0xff] 0.0
      %34 = vst [vmem:[#allocation2 + $0x8] sm:$0xff] 0.0
      %35 = vst [vmem:[#allocation2 + $0x10] sm:$0xff] 0.0
      %36 = vst [vmem:[#allocation2 + $0x18] sm:$0xff] 0.0
      %37 = vst [vmem:[#allocation2 + $0x20] sm:$0xff] 0.0
      %38 = vst [vmem:[#allocation2 + $0x28] sm:$0xff] 0.0
    $region21: #{mha_lora_forward.3} parent=1 // pred_fallthru
      _
    %v39 = vld [vmem:[#allocation2] sm:$0xff]
    %v40 = vld [vmem:[#allocation2 + $0x8] sm:$0xff]
    %v41 = vld [vmem:[#allocation2 + $0x10] sm:$0xff]
    %v42 = vld [vmem:[#allocation2 + $0x18] sm:$0xff]
    %v43 = vld [vmem:[#allocation2 + $0x20] sm:$0xff]
    %v44 = vld [vmem:[#allocation2 + $0x28] sm:$0xff]
    %v45 = vld [vmem:[%s0] sm:$0xff]
    %v46 = vld [vmem:[%s0 + $0x8] sm:$0xff]
    %v47 = vpack.c.bf16 %v46, %v45
    %v48 = vld [vmem:[#allocation3] sm:$0xff]
    %v49 = vld [vmem:[#allocation3 + $0x8] sm:$0xf]
    %v50 = vld [vmem:[#allocation3 + $0xc] sm:$0xff]
    %v51 = vld [vmem:[#allocation3 + $0x14] sm:$0xf]
    %v52 = vld [vmem:[#allocation3 + $0x18] sm:$0xff]
    %v53 = vld [vmem:[#allocation3 + $0x20] sm:$0xf]
    %v54 = vld [vmem:[#allocation3 + $0x24] sm:$0xff]
    %v55 = vld [vmem:[#allocation3 + $0x2c] sm:$0xf]
    %v56 = vld [vmem:[#allocation3 + $0x30] sm:$0xff]
    %v57 = vld [vmem:[#allocation3 + $0x38] sm:$0xf]
    %v58 = vld [vmem:[#allocation3 + $0x3c] sm:$0xff]
    %v59 = vld [vmem:[#allocation3 + $0x44] sm:$0xf]
    %v60 = vld [vmem:[#allocation3 + $0x48] sm:$0xff]
    %v61 = vld [vmem:[#allocation3 + $0x50] sm:$0xf]
    %v62 = vld [vmem:[#allocation3 + $0x54] sm:$0xff]
    %v63 = vld [vmem:[#allocation3 + $0x5c] sm:$0xf]
    %v64 = vld [vmem:[#allocation3 + $0x60] sm:$0xff]
    %v65 = vld [vmem:[#allocation3 + $0x68] sm:$0xf]
    %v66 = vld [vmem:[#allocation3 + $0x6c] sm:$0xff]
    %v67 = vld [vmem:[#allocation3 + $0x74] sm:$0xf]
    %v68 = vld [vmem:[#allocation3 + $0x78] sm:$0xff]
    %v69 = vld [vmem:[#allocation3 + $0x80] sm:$0xf]
    %v70 = vld [vmem:[#allocation3 + $0x84] sm:$0xff]
    %v71 = vld [vmem:[#allocation3 + $0x8c] sm:$0xf]
    %v72 = vld [vmem:[#allocation3 + $0x90] sm:$0xff]
    %v73 = vld [vmem:[#allocation3 + $0x98] sm:$0xf]
    %v74 = vld [vmem:[#allocation3 + $0x9c] sm:$0xff]
    %v75 = vld [vmem:[#allocation3 + $0xa4] sm:$0xf]
    %v76 = vld [vmem:[#allocation3 + $0xa8] sm:$0xff]
    %v77 = vld [vmem:[#allocation3 + $0xb0] sm:$0xf]
    %v78 = vld [vmem:[#allocation3 + $0xb4] sm:$0xff]
    %v79 = vld [vmem:[#allocation3 + $0xbc] sm:$0xf]
    %v112 = vunpack.c.l.b16 %v48
    %v113 = vunpack.c.h.b16 %v48
    %v114 = vunpack.c.l.b16 %v49
    %v115 = vunpack.c.l.b16 %v50
    %v116 = vunpack.c.h.b16 %v50
    %v117 = vunpack.c.l.b16 %v51
    %v118 = vunpack.c.l.b16 %v52
    %v119 = vunpack.c.h.b16 %v52
    %v120 = vunpack.c.l.b16 %v53
    %v121 = vunpack.c.l.b16 %v54
    %v122 = vunpack.c.h.b16 %v54
    %v123 = vunpack.c.l.b16 %v55
    %v124 = vunpack.c.l.b16 %v56
    %v125 = vunpack.c.h.b16 %v56
    %v126 = vunpack.c.l.b16 %v57
    %v127 = vunpack.c.l.b16 %v58
    %v128 = vunpack.c.h.b16 %v58
    %v129 = vunpack.c.l.b16 %v59
    %v130 = vunpack.c.l.b16 %v60
    %v131 = vunpack.c.h.b16 %v60
    %v132 = vunpack.c.l.b16 %v61
    %v133 = vunpack.c.l.b16 %v62
    %v134 = vunpack.c.h.b16 %v62
    %v135 = vunpack.c.l.b16 %v63
    %v136 = vunpack.c.l.b16 %v64
    %v137 = vunpack.c.h.b16 %v64
    %v138 = vunpack.c.l.b16 %v65
    %v139 = vunpack.c.l.b16 %v66
    %v140 = vunpack.c.h.b16 %v66
    %v141 = vunpack.c.l.b16 %v67
    %v142 = vunpack.c.l.b16 %v68
    %v143 = vunpack.c.h.b16 %v68
    %v144 = vunpack.c.l.b16 %v69
    %v145 = vunpack.c.l.b16 %v70
    %v146 = vunpack.c.h.b16 %v70
    %v147 = vunpack.c.l.b16 %v71
    %v148 = vunpack.c.l.b16 %v72
    %v149 = vunpack.c.h.b16 %v72
    %v150 = vunpack.c.l.b16 %v73
    %v151 = vunpack.c.l.b16 %v74
    %v152 = vunpack.c.h.b16 %v74
    %v153 = vunpack.c.l.b16 %v75
    %v154 = vunpack.c.l.b16 %v76
    %v155 = vunpack.c.h.b16 %v76
    %v156 = vunpack.c.l.b16 %v77
    %v157 = vunpack.c.l.b16 %v78
    %v158 = vunpack.c.h.b16 %v78
    %v159 = vunpack.c.l.b16 %v79
    %v160 = vpack.c.b16 %v115, %v112
    %v161 = vpack.c.b16 %v116, %v113
    %v162 = vpack.c.b16 %v117, %v114
    %v163 = vpack.c.b16 %v121, %v118
    %v164 = vpack.c.b16 %v122, %v119
    %v165 = vpack.c.b16 %v123, %v120
    %v166 = vpack.c.b16 %v127, %v124
    %v167 = vpack.c.b16 %v128, %v125
    %v168 = vpack.c.b16 %v129, %v126
    %v169 = vpack.c.b16 %v133, %v130
    %v170 = vpack.c.b16 %v134, %v131
    %v171 = vpack.c.b16 %v135, %v132
    %v172 = vpack.c.b16 %v139, %v136
    %v173 = vpack.c.b16 %v140, %v137
    %v174 = vpack.c.b16 %v141, %v138
    %v175 = vpack.c.b16 %v145, %v142
    %v176 = vpack.c.b16 %v146, %v143
    %v177 = vpack.c.b16 %v147, %v144
    %v178 = vpack.c.b16 %v151, %v148
    %v179 = vpack.c.b16 %v152, %v149
    %v180 = vpack.c.b16 %v153, %v150
    %v181 = vpack.c.b16 %v157, %v154
    %v182 = vpack.c.b16 %v158, %v155
    %v183 = vpack.c.b16 %v159, %v156
    %208 = vmatprep.subr.bf16.mxu0 %v182
    %209 = vmatpush1.bf16.msra.mxu0 %v181
    %210 = vmatprep.subr.bf16.mxu0 %v179
    %211 = vmatpush1.bf16.msra.mxu0 %v178
    %212 = vmatprep.subr.bf16.mxu0 %v176
    %213 = vmatpush1.bf16.msra.mxu0 %v175
    %214 = vmatprep.subr.bf16.mxu0 %v173
    %215 = vmatpush1.bf16.msra.mxu0 %v172
    %216 = vmatprep.subr.bf16.mxu0 %v170
    %217 = vmatpush1.bf16.msra.mxu0 %v169
    %218 = vmatprep.subr.bf16.mxu0 %v167
    %219 = vmatpush1.bf16.msra.mxu0 %v166
    %220 = vmatprep.subr.bf16.mxu0 %v164
    %221 = vmatpush1.bf16.msra.mxu0 %v163
    %222 = vmatprep.subr.bf16.mxu0 %v161
    %223 = vmatpush1.bf16.msra.mxu0 %v160
    %224 = vmatprep.subr.bf16.mxu0 0
    %225 = vmatpush2.bf16.msra.mxu0 0
    %226 = vmatprep.subr.bf16.mxu0 0
    %227 = vmatpush2.bf16.msra.mxu0 0
    %228 = vmatprep.subr.bf16.mxu0 0
    %229 = vmatpush2.bf16.msra.mxu0 0
    %230 = vmatprep.subr.bf16.mxu0 0
    %231 = vmatpush2.bf16.msra.mxu0 0
    %232 = vmatprep.subr.bf16.mxu0 0
    %233 = vmatpush2.bf16.msra.mxu0 0
    %234 = vmatprep.subr.bf16.mxu0 0
    %235 = vmatpush2.bf16.msra.mxu0 0
    %236 = vmatprep.subr.bf16.mxu0 0
    %237 = vmatpush2.bf16.msra.mxu0 0
    %238 = vmatprep.subr.bf16.mxu0 0
    %239 = vmatpush2.bf16.msra.mxu0 0
    %240 = vmatprep.mubr.bf16.mxu0 0
    %241 = vmatmul.mubr.bf16.gmra.mxu0 %v47
    %v242 = vpop.f32.mrf.mxu0
    %v243 = vadd.f32 0.0, %v242
    %v244 = vpop.f32.mrf.mxu0
    %v245 = vadd.f32 0.0, %v244
    %v246 = vpop.f32.mrf.mxu0
    %v247 = vadd.f32 0.0, %v246
    %v248 = vpop.f32.mrf.mxu0
    %v249 = vadd.f32 0.0, %v248
    %250 = vdwg.mxu0
    %251 = vmatprep.subr.bf16.mxu0 0
    %252 = vmatpush1.bf16.msra.mxu0 %v183
    %253 = vmatprep.subr.bf16.mxu0 0
    %254 = vmatpush1.bf16.msra.mxu0 %v180
    %255 = vmatprep.subr.bf16.mxu0 0
    %256 = vmatpush1.bf16.msra.mxu0 %v177
    %257 = vmatprep.subr.bf16.mxu0 0
    %258 = vmatpush1.bf16.msra.mxu0 %v174
    %259 = vmatprep.subr.bf16.mxu0 0
    %260 = vmatpush1.bf16.msra.mxu0 %v171
    %261 = vmatprep.subr.bf16.mxu0 0
    %262 = vmatpush1.bf16.msra.mxu0 %v168
    %263 = vmatprep.subr.bf16.mxu0 0
    %264 = vmatpush1.bf16.msra.mxu0 %v165
    %265 = vmatprep.subr.bf16.mxu0 0
    %266 = vmatpush1.bf16.msra.mxu0 %v162
    %267 = vmatprep.subr.bf16.mxu0 0
    %268 = vmatpush2.bf16.msra.mxu0 0
    %269 = vmatprep.subr.bf16.mxu0 0
    %270 = vmatpush2.bf16.msra.mxu0 0
    %271 = vmatprep.subr.bf16.mxu0 0
    %272 = vmatpush2.bf16.msra.mxu0 0
    %273 = vmatprep.subr.bf16.mxu0 0
    %274 = vmatpush2.bf16.msra.mxu0 0
    %275 = vmatprep.subr.bf16.mxu0 0
    %276 = vmatpush2.bf16.msra.mxu0 0
    %277 = vmatprep.subr.bf16.mxu0 0
    %278 = vmatpush2.bf16.msra.mxu0 0
    %279 = vmatprep.subr.bf16.mxu0 0
    %280 = vmatpush2.bf16.msra.mxu0 0
    %281 = vmatprep.subr.bf16.mxu0 0
    %282 = vmatpush2.bf16.msra.mxu0 0
    %283 = vmatprep.mubr.bf16.mxu0 0
    %284 = vmatmul.mubr.bf16.gmra.mxu0 %v47
    %v285 = vpop.f32.mrf.mxu0
    %v286 = vadd.f32 0.0, %v285
    %v287 = vpop.f32.mrf.mxu0
    %v288 = vpop.f32.mrf.mxu0
    %v289 = vadd.f32 0.0, %v288
    %v290 = vpop.f32.mrf.mxu0
    %291 = vdwg.mxu0
    %v292 = vadd.f32 %v39, %v243
    %v293 = vadd.f32 %v40, %v245
    %v294 = vadd.f32 %v41, %v286
    %v295 = vadd.f32 %v42, %v247
    %v296 = vadd.f32 %v43, %v249
    %v297 = vadd.f32 %v44, %v289
    %298 = vst [vmem:[#allocation2] sm:$0xff] %v292
    %299 = vst [vmem:[#allocation2 + $0x8] sm:$0xff] %v293
    %300 = vst [vmem:[#allocation2 + $0x10] sm:$0xff] %v294
    %301 = vst [vmem:[#allocation2 + $0x18] sm:$0xff] %v295
    %302 = vst [vmem:[#allocation2 + $0x20] sm:$0xff] %v296
    %303 = vst [vmem:[#allocation2 + $0x28] sm:$0xff] %v297
    // Predicated region
    $region22: #{mha_lora_forward.3} parent=1 // pred_check
      %p304 = pneg %p29
    $region23: #{mha_lora_forward.3} parent=1 // pred_check_branch
      %306 = sbr.rel (%p304) target = $region25
    $region24: #{mha_lora_forward.3} parent=1 // pred_region
      %v307 = vld [vmem:[#allocation2] sm:$0xff]
      %v308 = vld [vmem:[#allocation2 + $0x8] sm:$0xff]
      %v309 = vld [vmem:[#allocation2 + $0x10] sm:$0xff]
      %v310 = vld [vmem:[#allocation2 + $0x18] sm:$0xff]
      %v311 = vld [vmem:[#allocation2 + $0x20] sm:$0xff]
      %v312 = vld [vmem:[#allocation2 + $0x28] sm:$0xff]
      %v313 = vld [vmem:[%s2] sm:$0x7]
      %v315 = vlaneseq
      %v316 = vshrl.u32 %v315, 7
      %v317 = vsub.s32 0, %v316
      %v318 = vrot.slane %v313, %v317
      %v319 = vlaneseq
      %v320 = vshrl.u32 %v319, 7
      %v321 = vsub.s32 1, %v320
      %v322 = vrot.slane %v313, %v321
      %v323 = vlaneseq
      %v324 = vshrl.u32 %v323, 7
      %v325 = vsub.s32 2, %v324
      %v326 = vrot.slane %v313, %v325
      %v330 = vadd.f32 %v307, %v318
      %v331 = vadd.f32 %v308, %v322
      %v332 = vadd.f32 %v309, %v326
      %v333 = vadd.f32 %v310, %v318
      %v334 = vadd.f32 %v311, %v322
      %v335 = vadd.f32 %v312, %v326
      %v336 = vpack.c.bf16 %v333, %v330
      %v337 = vpack.c.bf16 %v334, %v331
      %v338 = vpack.c.bf16 %v335, %v332
      %v342 = vunpack.c.l.b16 %v336
      %v343 = vunpack.c.l.b16 %v337
      %v344 = vunpack.c.l.b16 %v338
      %v345 = vunpack.c.h.b16 %v336
      %v346 = vunpack.c.h.b16 %v337
      %v347 = vunpack.c.h.b16 %v338
      %v348 = vpack.c.b16 %v343, %v342
      %v349 = vpack.c.b16 %v344, %v344
      %v350 = vpack.c.b16 %v346, %v345
      %v351 = vpack.c.b16 %v347, %v347
      %356 = vst [vmem:[%s3] sm:$0xff] %v348
      %357 = vst [vmem:[%s3 + $0x8] sm:$0xf] %v349
      %358 = vst [vmem:[%s3 + $0xc] sm:$0xff] %v350
      %359 = vst [vmem:[%s3 + $0x14] sm:$0xf] %v351
    $region25: #{mha_lora_forward.3} parent=1 // pred_fallthru
      _
    // Predicated region
    $region26: #{mha_lora_forward.3} parent=1 // pred_check
      _
    $region27: #{mha_lora_forward.3} parent=1 // pred_check_branch
      %361 = sbr.rel (0) target = $region29
    $region28: #{mha_lora_forward.3} parent=1 // pred_region
      _
    $region29: #{mha_lora_forward.3} parent=1 // pred_fallthru
      _
    // Predicated region
    $region30: #{mha_lora_forward.3} parent=1 // pred_check
      _
    $region31: #{mha_lora_forward.3} parent=1 // pred_check_branch
      %363 = sbr.rel (0) target = $region33
    $region32: #{mha_lora_forward.3} parent=1 // pred_region
      _
    $region33: #{mha_lora_forward.3} parent=1 // pred_fallthru
      _
    %364 = vsyncpa [#allocation4], 1

// kernel: mha_lora_forward.4
$region0: #{mha_lora_forward.4}
  #allocation0 [shape = 'u32[]', space=smem, size = 0x4, offset = 0x4, fixed_abs, tag = 'smem constant byte address 0x4 - core index']
  #allocation1 [shape = 'u32[144,128]{1,0:T(1,128)}', space=vmem, size = 0x12000, scoped, tag = 'internal scratch']
  #allocation2 [shape = 'f32[8,4]{1,0:T(8,128)}', space=vmem, size = 0x1000, scoped, tag = 'scratch operand']
  #allocation3 [shape = 'f32[8,4]{1,0:T(8,128)}', space=vmem, size = 0x1000, scoped, tag = 'scratch operand']
  #allocation4 [shape = 'f32[8,128]{1,0:T(8,128)}', space=vmem, size = 0x1000, scoped, tag = 'scratch operand']
  %s0 = inlined_call_operand.vmem [shape: bf16[2,8,384], index: 0, kind: input, shape index: {}, may-alias: {0,1,2}]
  %s1 = inlined_call_operand.vmem [shape: bf16[2,8,384], index: 1, kind: input, shape index: {}, may-alias: {0,1,2}]
  %s2 = inlined_call_operand.vmem [shape: bf16[2,8,384], index: 2, kind: input, shape index: {}, may-alias: {0,1,2}]
  %s3 = inlined_call_operand.vmem [shape: bf16[2,8,128], index: 3, kind: output, shape index: {}]
  %s4 = sld [smem:[#allocation0]]
  $region53: #{mha_lora_forward.4} parent=0
    _
  %s6 = ssub.s32 1, %s4
  %s7 = scalar_select 0, %s6, %s4
  loop: start=0, step=1, limit=4
  $region2: #{mha_lora_forward.4} parent=0 // loop_pre_header
    _
  $region3: #{mha_lora_forward.4} parent=0 // loop_header
    %s9 = sphi 0, %s13
    %p10 = scmp.ge.s32.totalorder %s9, 4
    %s16 = sphi 0, %s35
    %s17 = sphi 0, %s31
    %s18 = sphi 0, %s27
    %s19 = sphi 0, %s16
    %s20 = sphi 0, %s17
    %s21 = sphi 0, %s18
    %s22 = sphi 0, %s19
    %s23 = sphi 0, %s20
    %s24 = sphi 0, %s21
    %s40 = sphi 0, %s42
    %s43 = sphi 0, %s40
    %s44 = sphi 0, %s43
    %s60 = sphi 0, %s44
    %s68 = sphi 0, %s70
    %s71 = sphi 0, %s68
    %s72 = sphi 0, %s71
    %s88 = sphi 0, %s72
    %s96 = sphi 0, %s98
    %s99 = sphi 0, %s96
    %s100 = sphi 0, %s99
    %s116 = sphi 0, %s100
    %s124 = sphi 0, %s126
    %s127 = sphi 0, %s124
    %s128 = sphi 0, %s127
    %s144 = sphi 0, %s128
  $region4: #{mha_lora_forward.4} parent=0 // loop_header_branch
    %12 = sbr.rel (%p10) target = $region8
  $region5: #{mha_lora_forward.4} parent=0 // loop_body
    %s14 = ssub.s32 %s9, 1
    %s15 = ssub.s32 %s9, 2
    %s25 = sadd.s32 1, %s18
    %p26 = scmp.ge.s32.totalorder %s25, 1
    %s27 = scalar_select %p26, 0, %s25
    %s28 = sadd.s32 1, %s17
    %s29 = scalar_select %p26, %s28, %s17
    %p30 = scmp.ge.s32.totalorder %s29, 1
    %s31 = scalar_select %p30, 0, %s29
    %s32 = sadd.s32 1, %s16
    %s33 = scalar_select %p30, %s32, %s16
    %p34 = scmp.ge.s32.totalorder %s33, 2
    %s35 = scalar_select %p34, 0, %s33
    %s36 = ssub.s32 %s16, %s35
    %s37 = ssub.s32 %s17, %s31
    %s38 = sor.u32 %s36, %s37
    %p39 = scmp.eq.s32.totalorder %s38, 0
    %s41 = sadd.s32 %s40, 1
    %s42 = scalar_select %p39, %s40, %s41
    %p45 = pneg %p39
    %p46 = scmp.eq.s32.totalorder %s9, 1
    %p47 = por %p45, %p46
    %p48 = scmp.ne.s32.totalorder %s40, %s43
    %p49 = scmp.eq.s32.totalorder %s9, 0
    %p50 = por %p48, %p49
    %p51 = scmp.ne.s32.totalorder %s40, %s43
    %p52 = scmp.eq.s32.totalorder %s14, 1
    %p53 = por %p51, %p52
    %p54 = scmp.ne.s32.totalorder %s43, %s44
    %p55 = scmp.eq.s32.totalorder %s14, 0
    %p56 = por %p54, %p55
    %p57 = scmp.ne.s32.totalorder %s43, %s44
    %p58 = scmp.eq.s32.totalorder %s15, 1
    %p59 = por %p57, %p58
    %p61 = scmp.ne.s32.totalorder %s44, %s60
    %p62 = scmp.eq.s32.totalorder %s15, 0
    %p63 = por %p61, %p62
    %s64 = ssub.s32 %s16, %s35
    %s65 = ssub.s32 %s18, %s27
    %s66 = sor.u32 %s64, %s65
    %p67 = scmp.eq.s32.totalorder %s66, 0
    %s69 = sadd.s32 %s68, 1
    %s70 = scalar_select %p67, %s68, %s69
    %p73 = pneg %p67
    %p74 = scmp.eq.s32.totalorder %s9, 1
    %p75 = por %p73, %p74
    %p76 = scmp.ne.s32.totalorder %s68, %s71
    %p77 = scmp.eq.s32.totalorder %s9, 0
    %p78 = por %p76, %p77
    %p79 = scmp.ne.s32.totalorder %s68, %s71
    %p80 = scmp.eq.s32.totalorder %s14, 1
    %p81 = por %p79, %p80
    %p82 = scmp.ne.s32.totalorder %s71, %s72
    %p83 = scmp.eq.s32.totalorder %s14, 0
    %p84 = por %p82, %p83
    %p85 = scmp.ne.s32.totalorder %s71, %s72
    %p86 = scmp.eq.s32.totalorder %s15, 1
    %p87 = por %p85, %p86
    %p89 = scmp.ne.s32.totalorder %s72, %s88
    %p90 = scmp.eq.s32.totalorder %s15, 0
    %p91 = por %p89, %p90
    %s92 = ssub.s32 %s16, %s35
    %s93 = ssub.s32 %s18, %s27
    %s94 = sor.u32 %s92, %s93
    %p95 = scmp.eq.s32.totalorder %s94, 0
    %s97 = sadd.s32 %s96, 1
    %s98 = scalar_select %p95, %s96, %s97
    %p101 = pneg %p95
    %p102 = scmp.eq.s32.totalorder %s9, 1
    %p103 = por %p101, %p102
    %p104 = scmp.ne.s32.totalorder %s96, %s99
    %p105 = scmp.eq.s32.totalorder %s9, 0
    %p106 = por %p104, %p105
    %p107 = scmp.ne.s32.totalorder %s96, %s99
    %p108 = scmp.eq.s32.totalorder %s14, 1
    %p109 = por %p107, %p108
    %p110 = scmp.ne.s32.totalorder %s99, %s100
    %p111 = scmp.eq.s32.totalorder %s14, 0
    %p112 = por %p110, %p111
    %p113 = scmp.ne.s32.totalorder %s99, %s100
    %p114 = scmp.eq.s32.totalorder %s15, 1
    %p115 = por %p113, %p114
    %p117 = scmp.ne.s32.totalorder %s100, %s116
    %p118 = scmp.eq.s32.totalorder %s15, 0
    %p119 = por %p117, %p118
    %s120 = ssub.s32 %s16, %s35
    %s121 = ssub.s32 %s17, %s31
    %s122 = sor.u32 %s120, %s121
    %p123 = scmp.eq.s32.totalorder %s122, 0
    %s125 = sadd.s32 %s124, 1
    %s126 = scalar_select %p123, %s124, %s125
    %p129 = pneg %p123
    %p130 = scmp.eq.s32.totalorder %s9, 1
    %p131 = por %p129, %p130
    %p132 = scmp.ne.s32.totalorder %s124, %s127
    %p133 = scmp.eq.s32.totalorder %s9, 0
    %p134 = por %p132, %p133
    %p135 = scmp.ne.s32.totalorder %s124, %s127
    %p136 = scmp.eq.s32.totalorder %s14, 1
    %p137 = por %p135, %p136
    %p138 = scmp.ne.s32.totalorder %s127, %s128
    %p139 = scmp.eq.s32.totalorder %s14, 0
    %p140 = por %p138, %p139
    %p141 = scmp.ne.s32.totalorder %s127, %s128
    %p142 = scmp.eq.s32.totalorder %s15, 1
    %p143 = por %p141, %p142
    %p145 = scmp.ne.s32.totalorder %s128, %s144
    %p146 = scmp.eq.s32.totalorder %s15, 0
    %p147 = por %p145, %p146
    %p148 = scmp.le.s32.totalorder 1, %s9
    %p149 = scmp.lt.s32.totalorder %s9, 3
    %p150 = pnand %p148, %p149
    %p151 = pneg %p150
    // Predicated region
    $region9: #{mha_lora_forward.4} parent=5 // pred_check
      _
    $region10: #{mha_lora_forward.4} parent=5 // pred_check_branch
      %153 = sbr.rel (%p150) target = $region12
    $region11: #{mha_lora_forward.4} parent=5 // pred_region
      %s154 = ssub.s32 %s9, 1
    $region12: #{mha_lora_forward.4} parent=5 // pred_fallthru
      _
    %p155 = scmp.lt.s32.totalorder %s9, 2
    // Predicated region
    $region13: #{mha_lora_forward.4} parent=5 // pred_check
      %p156 = pneg %p155
    $region14: #{mha_lora_forward.4} parent=5 // pred_check_branch
      %158 = sbr.rel (%p156) target = $region16
    $region15: #{mha_lora_forward.4} parent=5 // pred_region
      // Predicated region
      $region17: #{mha_lora_forward.4} parent=15 // pred_check
        %p159 = pneg %p50
      $region18: #{mha_lora_forward.4} parent=15 // pred_check_branch
        %161 = sbr.rel (%p159) target = $region20
      $region19: #{mha_lora_forward.4} parent=15 // pred_region
        %p162 = scmp.lt.s32.totalorder %s16, 1
        %s163 = scalar_select %p162, %s16, 1
        %p164 = scmp.lt.s32.totalorder %s17, 0
        %s165 = scalar_select %p164, %s17, 0
        %s166 = smul.addr %s165, 3
        %s167 = smul.addr %s163, 3
        %s168 = sadd.s32 %s166, %s167
        %s169 = smul.addr %s168, 4
        %s170 = scalar_lea.vmem %s0, %s169
      $region20: #{mha_lora_forward.4} parent=15 // pred_fallthru
        _
      // Predicated region
      $region21: #{mha_lora_forward.4} parent=15 // pred_check
        %p171 = pneg %p78
      $region22: #{mha_lora_forward.4} parent=15 // pred_check_branch
        %173 = sbr.rel (%p171) target = $region24
      $region23: #{mha_lora_forward.4} parent=15 // pred_region
        %p174 = scmp.lt.s32.totalorder %s16, 1
        %s175 = scalar_select %p174, %s16, 1
        %p176 = scmp.lt.s32.totalorder %s18, 0
        %s177 = scalar_select %p176, %s18, 0
        %s178 = smul.addr %s177, 3
        %s179 = sadd.s32 1, %s178
        %s180 = smul.addr %s175, 3
        %s181 = sadd.s32 %s179, %s180
        %s182 = smul.addr %s181, 4
        %s183 = scalar_lea.vmem %s1, %s182
      $region24: #{mha_lora_forward.4} parent=15 // pred_fallthru
        _
      // Predicated region
      $region25: #{mha_lora_forward.4} parent=15 // pred_check
        %p184 = pneg %p106
      $region26: #{mha_lora_forward.4} parent=15 // pred_check_branch
        %186 = sbr.rel (%p184) target = $region28
      $region27: #{mha_lora_forward.4} parent=15 // pred_region
        %p187 = scmp.lt.s32.totalorder %s16, 1
        %s188 = scalar_select %p187, %s16, 1
        %p189 = scmp.lt.s32.totalorder %s18, 0
        %s190 = scalar_select %p189, %s18, 0
        %s191 = smul.addr %s190, 3
        %s192 = sadd.s32 2, %s191
        %s193 = smul.addr %s188, 3
        %s194 = sadd.s32 %s192, %s193
        %s195 = smul.addr %s194, 4
        %s196 = scalar_lea.vmem %s2, %s195
      $region28: #{mha_lora_forward.4} parent=15 // pred_fallthru
        _
    $region16: #{mha_lora_forward.4} parent=5 // pred_fallthru
      _
    %p197 = scmp.le.s32.totalorder 1, %s9
    %p198 = scmp.lt.s32.totalorder %s9, 3
    %p199 = pnand %p197, %p198
    %p200 = pneg %p199
    // Predicated region
    $region29: #{mha_lora_forward.4} parent=5 // pred_check
      _
    $region30: #{mha_lora_forward.4} parent=5 // pred_check_branch
      %202 = sbr.rel (%p199) target = $region32
    $region31: #{mha_lora_forward.4} parent=5 // pred_region
      %s203 = ssub.s32 %s9, 1
      %p204 = scmp.lt.s32.totalorder %s19, 1
      %s205 = scalar_select %p204, %s19, 1
      %p206 = scmp.lt.s32.totalorder %s20, 0
      %s207 = scalar_select %p206, %s20, 0
      %s208 = smul.addr %s207, 3
      %s209 = smul.addr %s205, 3
      %s210 = sadd.s32 %s208, %s209
      %s211 = smul.addr %s210, 4
      %s212 = scalar_lea.vmem %s0, %s211
      %p213 = pneg %p56
      %p214 = pneg %p53
      %p215 = scmp.lt.s32.totalorder %s19, 1
      %s216 = scalar_select %p215, %s19, 1
      %p217 = scmp.lt.s32.totalorder %s21, 0
      %s218 = scalar_select %p217, %s21, 0
      %s219 = smul.addr %s218, 3
      %s220 = sadd.s32 1, %s219
      %s221 = smul.addr %s216, 3
      %s222 = sadd.s32 %s220, %s221
      %s223 = smul.addr %s222, 4
      %s224 = scalar_lea.vmem %s1, %s223
      %p225 = pneg %p84
      %p226 = pneg %p81
      %p227 = scmp.lt.s32.totalorder %s19, 1
      %s228 = scalar_select %p227, %s19, 1
      %p229 = scmp.lt.s32.totalorder %s21, 0
      %s230 = scalar_select %p229, %s21, 0
      %s231 = smul.addr %s230, 3
      %s232 = sadd.s32 2, %s231
      %s233 = smul.addr %s228, 3
      %s234 = sadd.s32 %s232, %s233
      %s235 = smul.addr %s234, 4
      %s236 = scalar_lea.vmem %s2, %s235
      %p237 = pneg %p112
      %p238 = pneg %p109
      %p239 = pneg %p140
      %p240 = pneg %p137
      %p241 = scmp.lt.s32.totalorder %s19, 1
      %s242 = scalar_select %p241, %s19, 1
      %p243 = scmp.lt.s32.totalorder %s20, 0
      %s244 = scalar_select %p243, %s20, 0
      %s245 = sadd.s32 %s244, %s242
      %s246 = smul.addr %s245, 4
      %s247 = scalar_lea.vmem %s3, %s246
      %p248 = scmp.lt.s32.totalorder %s19, 1
      %s249 = scalar_select %p248, %s19, 1
      %p250 = scmp.lt.s32.totalorder %s20, 0
      %s251 = scalar_select %p250, %s20, 0
      %s252 = smul.addr %s251, 3
      %s253 = smul.addr %s249, 3
      %s254 = sadd.s32 %s252, %s253
      %s255 = smul.addr %s254, 4
      %s256 = scalar_lea.vmem %s0, %s255
      %p257 = scmp.lt.s32.totalorder %s19, 1
      %s258 = scalar_select %p257, %s19, 1
      %p259 = scmp.lt.s32.totalorder %s21, 0
      %s260 = scalar_select %p259, %s21, 0
      %s261 = smul.addr %s260, 3
      %s262 = sadd.s32 1, %s261
      %s263 = smul.addr %s258, 3
      %s264 = sadd.s32 %s262, %s263
      %s265 = smul.addr %s264, 4
      %s266 = scalar_lea.vmem %s1, %s265
      %p267 = scmp.lt.s32.totalorder %s19, 1
      %s268 = scalar_select %p267, %s19, 1
      %p269 = scmp.lt.s32.totalorder %s21, 0
      %s270 = scalar_select %p269, %s21, 0
      %s271 = smul.addr %s270, 3
      %s272 = sadd.s32 2, %s271
      %s273 = smul.addr %s268, 3
      %s274 = sadd.s32 %s272, %s273
      %s275 = smul.addr %s274, 4
      %s276 = scalar_lea.vmem %s2, %s275
      %p277 = scmp.lt.s32.totalorder %s19, 1
      %s278 = scalar_select %p277, %s19, 1
      %p279 = scmp.lt.s32.totalorder %s20, 0
      %s280 = scalar_select %p279, %s20, 0
      %s281 = sadd.s32 %s280, %s278
      %s282 = smul.addr %s281, 4
      %s283 = scalar_lea.vmem %s3, %s282
      %p285 = scmp.eq.s32.totalorder %s21, 0
      // Predicated region
      $region33: #{mha_lora_forward.4} parent=31 // pred_check
        %p286 = pneg %p285
      $region34: #{mha_lora_forward.4} parent=31 // pred_check_branch
        %288 = sbr.rel (%p286) target = $region36
      $region35: #{mha_lora_forward.4} parent=31 // pred_region
        %vm289 = vcmask 31744
        %290 = vst.msk [vmem:[#allocation2] sm:$0xff] %vm289, -inf
        %291 = vst.msk [vmem:[#allocation3] sm:$0xff] %vm289, 0.0
        %292 = vst [vmem:[#allocation4] sm:$0xff] 0.0
      $region36: #{mha_lora_forward.4} parent=31 // pred_fallthru
        _
      %v293 = vld [vmem:[%s256] sm:$0xf]
      %v294 = vld [vmem:[%s266] sm:$0xf]
      %v295 = vld [vmem:[%s276] sm:$0xf]
      %v296 = vld [vmem:[#allocation2] sm:$0xff]
      %v297 = vld [vmem:[#allocation3] sm:$0xff]
      %vm298 = vcmask 261120
      %v300 = vsel %vm298, %v293, 0
      %v303 = vsel %vm298, %v294, 0
      %305 = vmatprep.subr.bf16.mxu0 0
      %306 = vmatpush1.bf16.xpose.msra.mxu0 0
      %307 = vmatprep.subr.bf16.mxu0 0
      %308 = vmatpush1.bf16.xpose.msra.mxu0 0
      %309 = vmatprep.subr.bf16.mxu0 0
      %310 = vmatpush1.bf16.xpose.msra.mxu0 0
      %311 = vmatprep.subr.bf16.mxu0 0
      %312 = vmatpush1.bf16.xpose.msra.mxu0 0
      %313 = vmatprep.subr.bf16.mxu0 0
      %314 = vmatpush1.bf16.xpose.msra.mxu0 0
      %315 = vmatprep.subr.bf16.mxu0 0
      %316 = vmatpush1.bf16.xpose.msra.mxu0 0
      %317 = vmatprep.subr.bf16.mxu0 0
      %318 = vmatpush1.bf16.xpose.msra.mxu0 0
      %319 = vmatprep.subr.bf16.mxu0 0
      %320 = vmatpush1.bf16.xpose.msra.mxu0 %v303
      %321 = vmatprep.subr.bf16.mxu0 0
      %322 = vmatpush2.bf16.xpose.msra.mxu0 0
      %323 = vmatprep.subr.bf16.mxu0 0
      %324 = vmatpush2.bf16.xpose.msra.mxu0 0
      %325 = vmatprep.subr.bf16.mxu0 0
      %326 = vmatpush2.bf16.xpose.msra.mxu0 0
      %327 = vmatprep.subr.bf16.mxu0 0
      %328 = vmatpush2.bf16.xpose.msra.mxu0 0
      %329 = vmatprep.subr.bf16.mxu0 0
      %330 = vmatpush2.bf16.xpose.msra.mxu0 0
      %331 = vmatprep.subr.bf16.mxu0 0
      %332 = vmatpush2.bf16.xpose.msra.mxu0 0
      %333 = vmatprep.subr.bf16.mxu0 0
      %334 = vmatpush2.bf16.xpose.msra.mxu0 0
      %335 = vmatprep.subr.bf16.mxu0 0
      %336 = vmatpush2.bf16.xpose.msra.mxu0 0
      %337 = vmatprep.mubr.bf16.mxu0 0
      %338 = vmatmul.mubr.bf16.gmra.mxu0 %v300
      %v339 = vpop.f32.mrf.mxu0
      %v340 = vadd.f32 0.0, %v339
      %v341 = vpop.f32.mrf.mxu0
      %v342 = vpop.f32.mrf.mxu0
      %v343 = vpop.f32.mrf.mxu0
      %344 = vdwg.mxu0
      %vm345 = vcmask 64512
      %v346 = vsel %vm345, %v340, -inf
      %347 = vmax.xlane.f32.xlu0 %v346
      %v348 = vpop.xlane.xlu0 %347
      %v349 = vmax.f32 %v296, %v348
      %v350 = vsub.f32 %v296, %v349
      %v351 = vmul.f32 %v350, 1.442695
      %v352 = vpow.pop %v351
      %354 = vset.pattern.permute.xlu0 0
      %355 = vperm.xlu0 %354, %v349
      %v356 = vpop.permute.xlu0 %355
      %v358 = vsub.f32 %v340, %v356
      %v359 = vmul.f32 %v358, 1.442695
      %v360 = vpow.pop %v359
      %v361 = vmul.f32 %v352, %v297
      %v362 = vsel %vm345, %v360, 0.0
      %363 = vadd.xlane.f32.xlu0 %v362
      %v364 = vpop.xlane.xlu0 %363
      %v365 = vadd.f32 %v361, %v364
      %v366 = vld [vmem:[#allocation4] sm:$0xff]
      %368 = vset.pattern.permute.xlu0 0
      %369 = vperm.xlu0 %368, %v352
      %v370 = vpop.permute.xlu0 %369
      %v372 = vmul.f32 %v370, %v366
      %v373 = vpack.c.bf16 %v360, %v360
      %v375 = vsel %vm345, %v373, 0
      %vm377 = vcmask 1043456
      %v379 = vsel %vm377, %v295, 0
      %381 = vmatprep.subr.bf16.mxu0 0
      %382 = vmatpush1.bf16.msra.mxu0 0
      %383 = vmatprep.subr.bf16.mxu0 0
      %384 = vmatpush1.bf16.msra.mxu0 0
      %385 = vmatprep.subr.bf16.mxu0 0
      %386 = vmatpush1.bf16.msra.mxu0 0
      %387 = vmatprep.subr.bf16.mxu0 0
      %388 = vmatpush1.bf16.msra.mxu0 0
      %389 = vmatprep.subr.bf16.mxu0 0
      %390 = vmatpush1.bf16.msra.mxu0 0
      %391 = vmatprep.subr.bf16.mxu0 0
      %392 = vmatpush1.bf16.msra.mxu0 0
      %393 = vmatprep.subr.bf16.mxu0 0
      %394 = vmatpush1.bf16.msra.mxu0 0
      %395 = vmatprep.subr.bf16.mxu0 0
      %396 = vmatpush1.bf16.msra.mxu0 %v379
      %397 = vmatprep.subr.bf16.mxu0 0
      %398 = vmatpush2.bf16.msra.mxu0 0
      %399 = vmatprep.subr.bf16.mxu0 0
      %400 = vmatpush2.bf16.msra.mxu0 0
      %401 = vmatprep.subr.bf16.mxu0 0
      %402 = vmatpush2.bf16.msra.mxu0 0
      %403 = vmatprep.subr.bf16.mxu0 0
      %404 = vmatpush2.bf16.msra.mxu0 0
      %405 = vmatprep.subr.bf16.mxu0 0
      %406 = vmatpush2.bf16.msra.mxu0 0
      %407 = vmatprep.subr.bf16.mxu0 0
      %408 = vmatpush2.bf16.msra.mxu0 0
      %409 = vmatprep.subr.bf16.mxu0 0
      %410 = vmatpush2.bf16.msra.mxu0 0
      %411 = vmatprep.subr.bf16.mxu0 0
      %412 = vmatpush2.bf16.msra.mxu0 0
      %413 = vmatprep.mubr.bf16.mxu0 0
      %414 = vmatmul.mubr.bf16.gmra.mxu0 %v375
      %v415 = vpop.f32.mrf.mxu0
      %v416 = vadd.f32 0.0, %v415
      %v417 = vpop.f32.mrf.mxu0
      %v418 = vpop.f32.mrf.mxu0
      %v419 = vpop.f32.mrf.mxu0
      %420 = vdwg.mxu0
      %v421 = vadd.f32 %v372, %v416
      %422 = vst.msk [vmem:[#allocation4] sm:$0xff] %vm298, %v421
      %v424 = vunpack.c.l.b16 %v293
      %v425 = vpack.c.b16 %v424, %v424
      %426 = vrot.lane.b32.xlu0 %v425, 96
      %v427 = vpop.permute.xlu0 %426
      %v429 = vunpack.c.l.b16 %v294
      %v430 = vpack.c.b16 %v429, %v429
      %431 = vrot.lane.b32.xlu0 %v430, 96
      %v432 = vpop.permute.xlu0 %431
      %v434 = vsel %vm298, %v427, 0
      %v437 = vsel %vm298, %v432, 0
      %439 = vmatprep.subr.bf16.mxu0 0
      %440 = vmatpush1.bf16.xpose.msra.mxu0 0
      %441 = vmatprep.subr.bf16.mxu0 0
      %442 = vmatpush1.bf16.xpose.msra.mxu0 0
      %443 = vmatprep.subr.bf16.mxu0 0
      %444 = vmatpush1.bf16.xpose.msra.mxu0 0
      %445 = vmatprep.subr.bf16.mxu0 0
      %446 = vmatpush1.bf16.xpose.msra.mxu0 0
      %447 = vmatprep.subr.bf16.mxu0 0
      %448 = vmatpush1.bf16.xpose.msra.mxu0 0
      %449 = vmatprep.subr.bf16.mxu0 0
      %450 = vmatpush1.bf16.xpose.msra.mxu0 0
      %451 = vmatprep.subr.bf16.mxu0 0
      %452 = vmatpush1.bf16.xpose.msra.mxu0 0
      %453 = vmatprep.subr.bf16.mxu0 0
      %454 = vmatpush1.bf16.xpose.msra.mxu0 %v437
      %455 = vmatprep.subr.bf16.mxu0 0
      %456 = vmatpush2.bf16.xpose.msra.mxu0 0
      %457 = vmatprep.subr.bf16.mxu0 0
      %458 = vmatpush2.bf16.xpose.msra.mxu0 0
      %459 = vmatprep.subr.bf16.mxu0 0
      %460 = vmatpush2.bf16.xpose.msra.mxu0 0
      %461 = vmatprep.subr.bf16.mxu0 0
      %462 = vmatpush2.bf16.xpose.msra.mxu0 0
      %463 = vmatprep.subr.bf16.mxu0 0
      %464 = vmatpush2.bf16.xpose.msra.mxu0 0
      %465 = vmatprep.subr.bf16.mxu0 0
      %466 = vmatpush2.bf16.xpose.msra.mxu0 0
      %467 = vmatprep.subr.bf16.mxu0 0
      %468 = vmatpush2.bf16.xpose.msra.mxu0 0
      %469 = vmatprep.subr.bf16.mxu0 0
      %470 = vmatpush2.bf16.xpose.msra.mxu0 0
      %471 = vmatprep.mubr.bf16.mxu0 0
      %472 = vmatmul.mubr.bf16.gmra.mxu0 %v434
      %v473 = vpop.f32.mrf.mxu0
      %v474 = vadd.f32 0.0, %v473
      %v475 = vpop.f32.mrf.mxu0
      %v476 = vpop.f32.mrf.mxu0
      %v477 = vpop.f32.mrf.mxu0
      %478 = vdwg.mxu0
      %v479 = vsel %vm345, %v474, -inf
      %480 = vmax.xlane.f32.xlu0 %v479
      %v481 = vpop.xlane.xlu0 %480
      %v482 = vmax.f32 %v296, %v481
      %v483 = vsub.f32 %v296, %v482
      %v484 = vmul.f32 %v483, 1.442695
      %v485 = vpow.pop %v484
      %487 = vset.pattern.permute.xlu0 1
      %488 = vperm.xlu0 %487, %v482
      %v489 = vpop.permute.xlu0 %488
      %v491 = vsub.f32 %v474, %v489
      %v492 = vmul.f32 %v491, 1.442695
      %v493 = vpow.pop %v492
      %v494 = vmul.f32 %v485, %v297
      %v495 = vsel %vm345, %v493, 0.0
      %496 = vadd.xlane.f32.xlu0 %v495
      %v497 = vpop.xlane.xlu0 %496
      %v498 = vadd.f32 %v494, %v497
      %v499 = vld [vmem:[#allocation4] sm:$0xff]
      %501 = vset.pattern.permute.xlu0 1
      %502 = vperm.xlu0 %501, %v485
      %v503 = vpop.permute.xlu0 %502
      %v505 = vmul.f32 %v503, %v499
      %v506 = vpack.c.bf16 %v493, %v493
      %v508 = vunpack.c.l.b16 %v295
      %v509 = vpack.c.b16 %v508, %v508
      %510 = vrot.lane.b32.xlu0 %v509, 96
      %v511 = vpop.permute.xlu0 %510
      %v513 = vsel %vm345, %v506, 0
      %v516 = vsel %vm377, %v511, 0
      %518 = vmatprep.subr.bf16.mxu0 0
      %519 = vmatpush1.bf16.msra.mxu0 0
      %520 = vmatprep.subr.bf16.mxu0 0
      %521 = vmatpush1.bf16.msra.mxu0 0
      %522 = vmatprep.subr.bf16.mxu0 0
      %523 = vmatpush1.bf16.msra.mxu0 0
      %524 = vmatprep.subr.bf16.mxu0 0
      %525 = vmatpush1.bf16.msra.mxu0 0
      %526 = vmatprep.subr.bf16.mxu0 0
      %527 = vmatpush1.bf16.msra.mxu0 0
      %528 = vmatprep.subr.bf16.mxu0 0
      %529 = vmatpush1.bf16.msra.mxu0 0
      %530 = vmatprep.subr.bf16.mxu0 0
      %531 = vmatpush1.bf16.msra.mxu0 0
      %532 = vmatprep.subr.bf16.mxu0 0
      %533 = vmatpush1.bf16.msra.mxu0 %v516
      %534 = vmatprep.subr.bf16.mxu0 0
      %535 = vmatpush2.bf16.msra.mxu0 0
      %536 = vmatprep.subr.bf16.mxu0 0
      %537 = vmatpush2.bf16.msra.mxu0 0
      %538 = vmatprep.subr.bf16.mxu0 0
      %539 = vmatpush2.bf16.msra.mxu0 0
      %540 = vmatprep.subr.bf16.mxu0 0
      %541 = vmatpush2.bf16.msra.mxu0 0
      %542 = vmatprep.subr.bf16.mxu0 0
      %543 = vmatpush2.bf16.msra.mxu0 0
      %544 = vmatprep.subr.bf16.mxu0 0
      %545 = vmatpush2.bf16.msra.mxu0 0
      %546 = vmatprep.subr.bf16.mxu0 0
      %547 = vmatpush2.bf16.msra.mxu0 0
      %548 = vmatprep.subr.bf16.mxu0 0
      %549 = vmatpush2.bf16.msra.mxu0 0
      %550 = vmatprep.mubr.bf16.mxu0 0
      %551 = vmatmul.mubr.bf16.gmra.mxu0 %v513
      %v552 = vpop.f32.mrf.mxu0
      %v553 = vadd.f32 0.0, %v552
      %v554 = vpop.f32.mrf.mxu0
      %v555 = vpop.f32.mrf.mxu0
      %v556 = vpop.f32.mrf.mxu0
      %557 = vdwg.mxu0
      %559 = vrot.lane.b32.xlu0 %v553, 32
      %v560 = vpop.permute.xlu0 %559
      %v562 = vadd.f32 %v505, %v560
      %vm563 = vcmask 523520
      %564 = vst.msk [vmem:[#allocation4] sm:$0xff] %vm563, %v562
      %565 = vrot.lane.b32.xlu0 %v425, 64
      %v566 = vpop.permute.xlu0 %565
      %567 = vrot.lane.b32.xlu0 %v430, 64
      %v568 = vpop.permute.xlu0 %567
      %v570 = vsel %vm298, %v566, 0
      %v573 = vsel %vm298, %v568, 0
      %575 = vmatprep.subr.bf16.mxu0 0
      %576 = vmatpush1.bf16.xpose.msra.mxu0 0
      %577 = vmatprep.subr.bf16.mxu0 0
      %578 = vmatpush1.bf16.xpose.msra.mxu0 0
      %579 = vmatprep.subr.bf16.mxu0 0
      %580 = vmatpush1.bf16.xpose.msra.mxu0 0
      %581 = vmatprep.subr.bf16.mxu0 0
      %582 = vmatpush1.bf16.xpose.msra.mxu0 0
      %583 = vmatprep.subr.bf16.mxu0 0
      %584 = vmatpush1.bf16.xpose.msra.mxu0 0
      %585 = vmatprep.subr.bf16.mxu0 0
      %586 = vmatpush1.bf16.xpose.msra.mxu0 0
      %587 = vmatprep.subr.bf16.mxu0 0
      %588 = vmatpush1.bf16.xpose.msra.mxu0 0
      %589 = vmatprep.subr.bf16.mxu0 0
      %590 = vmatpush1.bf16.xpose.msra.mxu0 %v573
      %591 = vmatprep.subr.bf16.mxu0 0
      %592 = vmatpush2.bf16.xpose.msra.mxu0 0
      %593 = vmatprep.subr.bf16.mxu0 0
      %594 = vmatpush2.bf16.xpose.msra.mxu0 0
      %595 = vmatprep.subr.bf16.mxu0 0
      %596 = vmatpush2.bf16.xpose.msra.mxu0 0
      %597 = vmatprep.subr.bf16.mxu0 0
      %598 = vmatpush2.bf16.xpose.msra.mxu0 0
      %599 = vmatprep.subr.bf16.mxu0 0
      %600 = vmatpush2.bf16.xpose.msra.mxu0 0
      %601 = vmatprep.subr.bf16.mxu0 0
      %602 = vmatpush2.bf16.xpose.msra.mxu0 0
      %603 = vmatprep.subr.bf16.mxu0 0
      %604 = vmatpush2.bf16.xpose.msra.mxu0 0
      %605 = vmatprep.subr.bf16.mxu0 0
      %606 = vmatpush2.bf16.xpose.msra.mxu0 0
      %607 = vmatprep.mubr.bf16.mxu0 0
      %608 = vmatmul.mubr.bf16.gmra.mxu0 %v570
      %v609 = vpop.f32.mrf.mxu0
      %v610 = vadd.f32 0.0, %v609
      %v611 = vpop.f32.mrf.mxu0
      %v612 = vpop.f32.mrf.mxu0
      %v613 = vpop.f32.mrf.mxu0
      %614 = vdwg.mxu0
      %v615 = vsel %vm345, %v610, -inf
      %616 = vmax.xlane.f32.xlu0 %v615
      %v617 = vpop.xlane.xlu0 %616
      %v618 = vmax.f32 %v296, %v617
      %v619 = vsub.f32 %v296, %v618
      %v620 = vmul.f32 %v619, 1.442695
      %v621 = vpow.pop %v620
      %623 = vset.pattern.permute.xlu0 2
      %624 = vperm.xlu0 %623, %v618
      %v625 = vpop.permute.xlu0 %624
      %v627 = vsub.f32 %v610, %v625
      %v628 = vmul.f32 %v627, 1.442695
      %v629 = vpow.pop %v628
      %v630 = vmul.f32 %v621, %v297
      %v631 = vsel %vm345, %v629, 0.0
      %632 = vadd.xlane.f32.xlu0 %v631
      %v633 = vpop.xlane.xlu0 %632
      %v634 = vadd.f32 %v630, %v633
      %v635 = vld [vmem:[#allocation4] sm:$0xff]
      %637 = vset.pattern.permute.xlu0 2
      %638 = vperm.xlu0 %637, %v621
      %v639 = vpop.permute.xlu0 %638
      %v641 = vmul.f32 %v639, %v635
      %v642 = vpack.c.bf16 %v629, %v629
      %643 = vrot.lane.b32.xlu0 %v509, 64
      %v644 = vpop.permute.xlu0 %643
      %v646 = vsel %vm345, %v642, 0
      %v649 = vsel %vm377, %v644, 0
      %651 = vmatprep.subr.bf16.mxu0 0
      %652 = vmatpush1.bf16.msra.mxu0 0
      %653 = vmatprep.subr.bf16.mxu0 0
      %654 = vmatpush1.bf16.msra.mxu0 0
      %655 = vmatprep.subr.bf16.mxu0 0
      %656 = vmatpush1.bf16.msra.mxu0 0
      %657 = vmatprep.subr.bf16.mxu0 0
      %658 = vmatpush1.bf16.msra.mxu0 0
      %659 = vmatprep.subr.bf16.mxu0 0
      %660 = vmatpush1.bf16.msra.mxu0 0
      %661 = vmatprep.subr.bf16.mxu0 0
      %662 = vmatpush1.bf16.msra.mxu0 0
      %663 = vmatprep.subr.bf16.mxu0 0
      %664 = vmatpush1.bf16.msra.mxu0 0
      %665 = vmatprep.subr.bf16.mxu0 0
      %666 = vmatpush1.bf16.msra.mxu0 %v649
      %667 = vmatprep.subr.bf16.mxu0 0
      %668 = vmatpush2.bf16.msra.mxu0 0
      %669 = vmatprep.subr.bf16.mxu0 0
      %670 = vmatpush2.bf16.msra.mxu0 0
      %671 = vmatprep.subr.bf16.mxu0 0
      %672 = vmatpush2.bf16.msra.mxu0 0
      %673 = vmatprep.subr.bf16.mxu0 0
      %674 = vmatpush2.bf16.msra.mxu0 0
      %675 = vmatprep.subr.bf16.mxu0 0
      %676 = vmatpush2.bf16.msra.mxu0 0
      %677 = vmatprep.subr.bf16.mxu0 0
      %678 = vmatpush2.bf16.msra.mxu0 0
      %679 = vmatprep.subr.bf16.mxu0 0
      %680 = vmatpush2.bf16.msra.mxu0 0
      %681 = vmatprep.subr.bf16.mxu0 0
      %682 = vmatpush2.bf16.msra.mxu0 0
      %683 = vmatprep.mubr.bf16.mxu0 0
      %684 = vmatmul.mubr.bf16.gmra.mxu0 %v646
      %v685 = vpop.f32.mrf.mxu0
      %v686 = vadd.f32 0.0, %v685
      %v687 = vpop.f32.mrf.mxu0
      %v688 = vpop.f32.mrf.mxu0
      %v689 = vpop.f32.mrf.mxu0
      %690 = vdwg.mxu0
      %692 = vrot.lane.b32.xlu0 %v686, 64
      %v693 = vpop.permute.xlu0 %692
      %v695 = vadd.f32 %v641, %v693
      %vm696 = vcmask 785920
      %697 = vst.msk [vmem:[#allocation4] sm:$0xff] %vm696, %v695
      %698 = vrot.lane.b32.xlu0 %v425, 32
      %v699 = vpop.permute.xlu0 %698
      %700 = vrot.lane.b32.xlu0 %v430, 32
      %v701 = vpop.permute.xlu0 %700
      %v703 = vsel %vm298, %v699, 0
      %v706 = vsel %vm298, %v701, 0
      %708 = vmatprep.subr.bf16.mxu0 0
      %709 = vmatpush1.bf16.xpose.msra.mxu0 0
      %710 = vmatprep.subr.bf16.mxu0 0
      %711 = vmatpush1.bf16.xpose.msra.mxu0 0
      %712 = vmatprep.subr.bf16.mxu0 0
      %713 = vmatpush1.bf16.xpose.msra.mxu0 0
      %714 = vmatprep.subr.bf16.mxu0 0
      %715 = vmatpush1.bf16.xpose.msra.mxu0 0
      %716 = vmatprep.subr.bf16.mxu0 0
      %717 = vmatpush1.bf16.xpose.msra.mxu0 0
      %718 = vmatprep.subr.bf16.mxu0 0
      %719 = vmatpush1.bf16.xpose.msra.mxu0 0
      %720 = vmatprep.subr.bf16.mxu0 0
      %721 = vmatpush1.bf16.xpose.msra.mxu0 0
      %722 = vmatprep.subr.bf16.mxu0 0
      %723 = vmatpush1.bf16.xpose.msra.mxu0 %v706
      %724 = vmatprep.subr.bf16.mxu0 0
      %725 = vmatpush2.bf16.xpose.msra.mxu0 0
      %726 = vmatprep.subr.bf16.mxu0 0
      %727 = vmatpush2.bf16.xpose.msra.mxu0 0
      %728 = vmatprep.subr.bf16.mxu0 0
      %729 = vmatpush2.bf16.xpose.msra.mxu0 0
      %730 = vmatprep.subr.bf16.mxu0 0
      %731 = vmatpush2.bf16.xpose.msra.mxu0 0
      %732 = vmatprep.subr.bf16.mxu0 0
      %733 = vmatpush2.bf16.xpose.msra.mxu0 0
      %734 = vmatprep.subr.bf16.mxu0 0
      %735 = vmatpush2.bf16.xpose.msra.mxu0 0
      %736 = vmatprep.subr.bf16.mxu0 0
      %737 = vmatpush2.bf16.xpose.msra.mxu0 0
      %738 = vmatprep.subr.bf16.mxu0 0
      %739 = vmatpush2.bf16.xpose.msra.mxu0 0
      %740 = vmatprep.mubr.bf16.mxu0 0
      %741 = vmatmul.mubr.bf16.gmra.mxu0 %v703
      %v742 = vpop.f32.mrf.mxu0
      %v743 = vadd.f32 0.0, %v742
      %v744 = vpop.f32.mrf.mxu0
      %v745 = vpop.f32.mrf.mxu0
      %v746 = vpop.f32.mrf.mxu0
      %747 = vdwg.mxu0
      %v748 = vsel %vm345, %v743, -inf
      %749 = vmax.xlane.f32.xlu0 %v748
      %v750 = vpop.xlane.xlu0 %749
      %v751 = vmax.f32 %v296, %v750
      %v752 = vsub.f32 %v296, %v751
      %v753 = vmul.f32 %v752, 1.442695
      %v754 = vpow.pop %v753
      %756 = vset.pattern.permute.xlu0 3
      %757 = vperm.xlu0 %756, %v751
      %v758 = vpop.permute.xlu0 %757
      %v760 = vsub.f32 %v743, %v758
      %v761 = vmul.f32 %v760, 1.442695
      %v762 = vpow.pop %v761
      %v763 = vmul.f32 %v754, %v297
      %v764 = vsel %vm345, %v762, 0.0
      %765 = vadd.xlane.f32.xlu0 %v764
      %v766 = vpop.xlane.xlu0 %765
      %v767 = vadd.f32 %v763, %v766
      %v768 = vld [vmem:[#allocation4] sm:$0xff]
      %770 = vset.pattern.permute.xlu0 3
      %771 = vperm.xlu0 %770, %v754
      %v772 = vpop.permute.xlu0 %771
      %v774 = vmul.f32 %v772, %v768
      %v775 = vpack.c.bf16 %v762, %v762
      %776 = vrot.lane.b32.xlu0 %v509, 32
      %v777 = vpop.permute.xlu0 %776
      %v779 = vsel %vm345, %v775, 0
      %v782 = vsel %vm377, %v777, 0
      %784 = vmatprep.subr.bf16.mxu0 0
      %785 = vmatpush1.bf16.msra.mxu0 0
      %786 = vmatprep.subr.bf16.mxu0 0
      %787 = vmatpush1.bf16.msra.mxu0 0
      %788 = vmatprep.subr.bf16.mxu0 0
      %789 = vmatpush1.bf16.msra.mxu0 0
      %790 = vmatprep.subr.bf16.mxu0 0
      %791 = vmatpush1.bf16.msra.mxu0 0
      %792 = vmatprep.subr.bf16.mxu0 0
      %793 = vmatpush1.bf16.msra.mxu0 0
      %794 = vmatprep.subr.bf16.mxu0 0
      %795 = vmatpush1.bf16.msra.mxu0 0
      %796 = vmatprep.subr.bf16.mxu0 0
      %797 = vmatpush1.bf16.msra.mxu0 0
      %798 = vmatprep.subr.bf16.mxu0 0
      %799 = vmatpush1.bf16.msra.mxu0 %v782
      %800 = vmatprep.subr.bf16.mxu0 0
      %801 = vmatpush2.bf16.msra.mxu0 0
      %802 = vmatprep.subr.bf16.mxu0 0
      %803 = vmatpush2.bf16.msra.mxu0 0
      %804 = vmatprep.subr.bf16.mxu0 0
      %805 = vmatpush2.bf16.msra.mxu0 0
      %806 = vmatprep.subr.bf16.mxu0 0
      %807 = vmatpush2.bf16.msra.mxu0 0
      %808 = vmatprep.subr.bf16.mxu0 0
      %809 = vmatpush2.bf16.msra.mxu0 0
      %810 = vmatprep.subr.bf16.mxu0 0
      %811 = vmatpush2.bf16.msra.mxu0 0
      %812 = vmatprep.subr.bf16.mxu0 0
      %813 = vmatpush2.bf16.msra.mxu0 0
      %814 = vmatprep.subr.bf16.mxu0 0
      %815 = vmatpush2.bf16.msra.mxu0 0
      %816 = vmatprep.mubr.bf16.mxu0 0
      %817 = vmatmul.mubr.bf16.gmra.mxu0 %v779
      %v818 = vpop.f32.mrf.mxu0
      %v819 = vadd.f32 0.0, %v818
      %v820 = vpop.f32.mrf.mxu0
      %v821 = vpop.f32.mrf.mxu0
      %v822 = vpop.f32.mrf.mxu0
      %823 = vdwg.mxu0
      %825 = vrot.lane.b32.xlu0 %v819, 96
      %v826 = vpop.permute.xlu0 %825
      %v828 = vadd.f32 %v774, %v826
      %vm829 = vcmask 1048320
      %830 = vst.msk [vmem:[#allocation4] sm:$0xff] %vm829, %v828
      %vm831 = vcmask 7168
      %v832 = vsel %vm831, %v349, %v482
      %vm833 = vcmask 15360
      %v834 = vsel %vm833, %v832, %v618
      %vm835 = vcmask 23552
      %v836 = vsel %vm835, %v834, %v751
      %vm837 = vcmask 31744
      %838 = vst.msk [vmem:[#allocation2] sm:$0xff] %vm837, %v836
      %v839 = vsel %vm831, %v365, %v498
      %v840 = vsel %vm833, %v839, %v634
      %v841 = vsel %vm835, %v840, %v767
      %842 = vst.msk [vmem:[#allocation3] sm:$0xff] %vm837, %v841
      // Predicated region
      $region37: #{mha_lora_forward.4} parent=31 // pred_check
        %p843 = pneg %p285
      $region38: #{mha_lora_forward.4} parent=31 // pred_check_branch
        %845 = sbr.rel (%p843) target = $region40
      $region39: #{mha_lora_forward.4} parent=31 // pred_region
        %v846 = vld [vmem:[#allocation3] sm:$0xff]
        %v847 = vrcp.pop %v846
        %v848 = vld [vmem:[#allocation4] sm:$0xff]
        %850 = vset.pattern.permute.xlu0 0
        %851 = vperm.xlu0 %850, %v847
        %v852 = vpop.permute.xlu0 %851
        %v854 = vmul.f32 %v848, %v852
        %855 = vset.pattern.permute.xlu0 1
        %856 = vperm.xlu0 %855, %v847
        %v857 = vpop.permute.xlu0 %856
        %v859 = vmul.f32 %v848, %v857
        %860 = vset.pattern.permute.xlu0 2
        %861 = vperm.xlu0 %860, %v847
        %v862 = vpop.permute.xlu0 %861
        %v864 = vmul.f32 %v848, %v862
        %865 = vset.pattern.permute.xlu0 3
        %866 = vperm.xlu0 %865, %v847
        %v867 = vpop.permute.xlu0 %866
        %v869 = vmul.f32 %v848, %v867
        %v870 = vsel %vm298, %v854, %v859
        %vm871 = vcmask 523264
        %v872 = vsel %vm871, %v870, %v864
        %vm873 = vcmask 785408
        %v874 = vsel %vm873, %v872, %v869
        %v875 = vpack.c.bf16 %v874, %v874
        %876 = vst [vmem:[%s283] sm:$0xf] %v875
      $region40: #{mha_lora_forward.4} parent=31 // pred_fallthru
        _
      %p877 = scmp.lt.s32.totalorder %s19, 1
      %s878 = scalar_select %p877, %s19, 1
      %p879 = scmp.lt.s32.totalorder %s20, 0
      %s880 = scalar_select %p879, %s20, 0
      %s881 = sadd.s32 %s880, %s878
      %s882 = smul.addr %s881, 4
      %s883 = scalar_lea.vmem %s3, %s882
      // Predicated region
      $region41: #{mha_lora_forward.4} parent=31 // pred_check
        %p884 = pneg %p137
      $region42: #{mha_lora_forward.4} parent=31 // pred_check_branch
        %886 = sbr.rel (%p884) target = $region44
      $region43: #{mha_lora_forward.4} parent=31 // pred_region
        _
      $region44: #{mha_lora_forward.4} parent=31 // pred_fallthru
        _
    $region32: #{mha_lora_forward.4} parent=5 // pred_fallthru
      _
    %p887 = scmp.le.s32.totalorder 2, %s9
    // Predicated region
    $region45: #{mha_lora_forward.4} parent=5 // pred_check
      %p888 = pneg %p887
    $region46: #{mha_lora_forward.4} parent=5 // pred_check_branch
      %890 = sbr.rel (%p888) target = $region48
    $region47: #{mha_lora_forward.4} parent=5 // pred_region
      %s891 = ssub.s32 %s9, 2
      // Predicated region
      $region49: #{mha_lora_forward.4} parent=47 // pred_check
        %p892 = pneg %p143
      $region50: #{mha_lora_forward.4} parent=47 // pred_check_branch
        %894 = sbr.rel (%p892) target = $region52
      $region51: #{mha_lora_forward.4} parent=47 // pred_region
        %p895 = scmp.lt.s32.totalorder %s22, 1
        %s896 = scalar_select %p895, %s22, 1
        %p897 = scmp.lt.s32.totalorder %s23, 0
        %s898 = scalar_select %p897, %s23, 0
        %s899 = sadd.s32 %s898, %s896
        %s900 = smul.addr %s899, 4
        %s901 = scalar_lea.vmem %s3, %s900
      $region52: #{mha_lora_forward.4} parent=47 // pred_fallthru
        _
    $region48: #{mha_lora_forward.4} parent=5 // pred_fallthru
      _
  $region6: #{mha_lora_forward.4} parent=0 // loop_footer
    %s13 = sadd.s32 1, %s9
  $region7: #{mha_lora_forward.4} parent=0 // loop_footer_branch
    %8 = sbr.rel target = $region3
  $region8: #{mha_lora_forward.4} parent=0 // loop_exit
    _

</llo_original>
